<compile_context>
chip_gen: v7x
topology: tpu7x:2x2x1
jax: 0.10.0
libtpu: 0.0.40
codegen_flags: <defaults>
</compile_context>

<pallas_src>
import functools

import jax
import jax.numpy as jnp
from jax.experimental import pallas as pl
from jax.experimental.pallas import tpu as pltpu


# ----------------------------------------------------------------------------
# Fused EncoderLayer kernel (single invocation, whole batch resident in VMEM)
# ----------------------------------------------------------------------------
def _encoder_layer_kernel(x_ref, bias_ref, npad_ref,
                          wqkv_ref, bqkv_ref, wfc_ref, bfc_ref,
                          g1_ref, be1_ref,
                          w1_ref, b1_ref, w2_ref, b2_ref,
                          g2_ref, be2_ref,
                          out_ref, attn_ref,
                          *, n_head, d_k, d_v):
    B, L, D = x_ref.shape
    R = B * L
    nqk = n_head * d_k
    nv = n_head * d_v

    x = x_ref[...]                         # (B, L, D)
    x2 = x.reshape(R, D)                   # free major-dim merge
    bias = bias_ref[...]                   # (B, L, L) additive mask bias
    npad2 = npad_ref[...].reshape(R, 1)    # (R, 1)

    # --- fused Q/K/V projection: one wide MXU pass -----------------------------
    inv_temp = jnp.float32(1.0 / (float(d_k) ** 0.5))
    qkv = (jnp.dot(x2, wqkv_ref[...], preferred_element_type=jnp.float32)
           + bqkv_ref[...])                                        # (R, 2*nqk+nv)
    q = (qkv[:, :nqk] * inv_temp).reshape(B, L, nqk)   # 1/sqrt(d_k) folded into q
    k = qkv[:, nqk:2 * nqk].reshape(B, L, nqk)
    v = qkv[:, 2 * nqk:].reshape(B, L, nv)

    wfc = wfc_ref[...]                     # (nv, D), loaded once

    # --- per-head attention, statically unrolled --------------------------------
    # Each contraction is a leading-batch 3-D dot (batched over B) or a 2-D
    # matmul; no transposes, and the head context folds straight into the
    # output projection accumulator.
    o = jnp.zeros((R, D), jnp.float32)
    for h in range(n_head):
        qh = q[:, :, h * d_k:(h + 1) * d_k]            # (B, L, d_k)
        kh = k[:, :, h * d_k:(h + 1) * d_k]
        vh = v[:, :, h * d_v:(h + 1) * d_v]

        s = jnp.einsum('bqd,bkd->bqk', qh, kh,
                       preferred_element_type=jnp.float32) + bias   # (B, L, L)

        # exact, row-stable softmax (attn weights are an emitted output)
        m = jnp.max(s, axis=-1, keepdims=True)
        e = jnp.exp(s - m)
        a = e / jnp.sum(e, axis=-1, keepdims=True)

        attn_ref[h] = a                                 # head-major, direct store

        ctx = jnp.einsum('bqk,bkd->bqd', a, vh,
                         preferred_element_type=jnp.float32)         # (B, L, d_v)
        o = o + jnp.dot(ctx.reshape(R, d_v),
                        wfc[h * d_v:(h + 1) * d_v, :],
                        preferred_element_type=jnp.float32)

    o = o + bfc_ref[...]

    # --- residual + LayerNorm (eps=1e-5, biased var, as torch.nn.LayerNorm) -----
    res = o + x2
    mean = jnp.mean(res, axis=-1, keepdims=True)
    var = jnp.mean((res - mean) ** 2, axis=-1, keepdims=True)
    y = (res - mean) * jax.lax.rsqrt(var + 1e-5) * g1_ref[...] + be1_ref[...]
    y = y * npad2                                       # enc_output *= non_pad_mask

    # --- position-wise FFN (Conv1d k=1 -> ReLU -> Conv1d k=1) + add&norm --------
    hdn = jnp.dot(y, w1_ref[...], preferred_element_type=jnp.float32) + b1_ref[...]
    hdn = jnp.maximum(hdn, 0.0)
    o2 = jnp.dot(hdn, w2_ref[...], preferred_element_type=jnp.float32) + b2_ref[...]

    res2 = o2 + y
    mean2 = jnp.mean(res2, axis=-1, keepdims=True)
    var2 = jnp.mean((res2 - mean2) ** 2, axis=-1, keepdims=True)
    y2 = (res2 - mean2) * jax.lax.rsqrt(var2 + 1e-5) * g2_ref[...] + be2_ref[...]

    out_ref[...] = (y2 * npad2).reshape(B, L, D)        # enc_output *= non_pad_mask


# ----------------------------------------------------------------------------
# Wrapper
# ----------------------------------------------------------------------------
def encoder_layer(enc_input, non_pad_mask, slf_attn_mask, params,
                  *, n_head, d_k, d_v):
    B, L, D = enc_input.shape

    # Fuse the three projection weights/biases (one wide matmul in the kernel).
    wqkv = jnp.concatenate([params["wq"], params["wk"], params["wv"]], axis=1)
    bqkv = jnp.concatenate([params["bq"], params["bk"], params["bv"]], axis=1)

    # Precompute the additive attention bias outside the kernel (removes the
    # per-call compare+select from the VPU). -1e9 (finite) instead of -inf so
    # fully-masked query rows give a uniform distribution instead of NaN.
    attn_bias = jnp.where(slf_attn_mask > 0.5,
                          jnp.float32(-1e9), jnp.float32(0.0))

    fused = pl.pallas_call(
        functools.partial(_encoder_layer_kernel,
                          n_head=n_head, d_k=d_k, d_v=d_v),
        out_shape=(
            jax.ShapeDtypeStruct((B, L, D), jnp.float32),
            jax.ShapeDtypeStruct((n_head, B, L, L), jnp.float32),
        ),
        # No grid: whole-array blocks, single invocation, no double-buffering
        # of constant weights.  Explicit VMEM budget per review.
        compiler_params=pltpu.CompilerParams(
            vmem_limit_bytes=32 * 1024 * 1024),
    )

    enc_output, attn = fused(
        enc_input, attn_bias, non_pad_mask,
        wqkv, bqkv, params["wfc"], params["bfc"],
        params["ln1_g"], params["ln1_b"],
        params["w1"], params["b1"], params["w2"], params["b2"],
        params["ln2_g"], params["ln2_b"],
    )

    # (n_head, B, L, L) -> (n_head*B, L, L): free major-dim merge, head-major
    # ordering matches the PyTorch reference (index = h * B + b).
    enc_slf_attn = attn.reshape(n_head * B, L, L)
    return enc_output, enc_slf_attn


# ----------------------------------------------------------------------------
# Pure-JAX reference (same math, used only for the self-check)
# ----------------------------------------------------------------------------
def _reference(enc_input, non_pad_mask, slf_attn_mask, params,
               *, n_head, d_k, d_v):
    B, L, D = enc_input.shape
    q = enc_input @ params["wq"] + params["bq"]
    k = enc_input @ params["wk"] + params["bk"]
    v = enc_input @ params["wv"] + params["bv"]
    q = q.reshape(B, L, n_head, d_k).transpose(2, 0, 1, 3)
    k = k.reshape(B, L, n_head, d_k).transpose(2, 0, 1, 3)
    v = v.reshape(B, L, n_head, d_v).transpose(2, 0, 1, 3)
    s = jnp.einsum('hbqd,hbkd->hbqk', q, k) / (d_k ** 0.5)
    s = s + jnp.where(slf_attn_mask > 0.5, -1e9, 0.0)[None]
    a = jax.nn.softmax(s, axis=-1)
    ctx = jnp.einsum('hbqk,hbkd->hbqd', a, v)
    ctx = ctx.transpose(1, 2, 0, 3).reshape(B, L, n_head * d_v)
    o = ctx @ params["wfc"] + params["bfc"]

    def ln(t, g, b):
        mu = t.mean(-1, keepdims=True)
        var = ((t - mu) ** 2).mean(-1, keepdims=True)
        return (t - mu) * jax.lax.rsqrt(var + 1e-5) * g + b

    y = ln(o + enc_input, params["ln1_g"], params["ln1_b"]) * non_pad_mask
    h = jnp.maximum(y @ params["w1"] + params["b1"], 0.0)
    o2 = h @ params["w2"] + params["b2"]
    y2 = ln(o2 + y, params["ln2_g"], params["ln2_b"]) * non_pad_mask
    return y2, a.reshape(n_head * B, L, L)


# ----------------------------------------------------------------------------
# Deterministic parameter init (shapes from EncoderLayer.__init__)
# ----------------------------------------------------------------------------
def init_params(key, d_model, d_inner, n_head, d_k, d_v):
    ks = jax.random.split(key, 6)
    f32 = jnp.float32
    return {
        "wq": jax.random.normal(ks[0], (d_model, n_head * d_k), f32)
              * (2.0 / (d_model + d_k)) ** 0.5,
        "bq": jnp.zeros((1, n_head * d_k), f32),
        "wk": jax.random.normal(ks[1], (d_model, n_head * d_k), f32)
              * (2.0 / (d_model + d_k)) ** 0.5,
        "bk": jnp.zeros((1, n_head * d_k), f32),
        "wv": jax.random.normal(ks[2], (d_model, n_head * d_v), f32)
              * (2.0 / (d_model + d_v)) ** 0.5,
        "bv": jnp.zeros((1, n_head * d_v), f32),
        "wfc": jax.random.normal(ks[3], (n_head * d_v, d_model), f32)
               * (2.0 / (n_head * d_v + d_model)) ** 0.5,
        "bfc": jnp.zeros((1, d_model), f32),
        "ln1_g": jnp.ones((1, d_model), f32),
        "ln1_b": jnp.zeros((1, d_model), f32),
        "w1": jax.random.normal(ks[4], (d_model, d_inner), f32)
              * (1.0 / d_model) ** 0.5,
        "b1": jnp.zeros((1, d_inner), f32),
        "w2": jax.random.normal(ks[5], (d_inner, d_model), f32)
              * (1.0 / d_inner) ** 0.5,
        "b2": jnp.zeros((1, d_model), f32),
        "ln2_g": jnp.ones((1, d_model), f32),
        "ln2_b": jnp.zeros((1, d_model), f32),
    }


if __name__ == "__main__":
    # TODO(synk): dropout (p=0.1) omitted (eval-mode identity); ipdb breakpoint skipped.
    B, L = 2, 8
    d_model, d_inner, n_head, d_k, d_v = 32, 64, 4, 8, 8

    key = jax.random.PRNGKey(0)
    k_x, k_p = jax.random.split(key)

    enc_input = jax.random.normal(k_x, (B, L, d_model), jnp.float32)

    # sequence lengths [8, 6]: second sequence has 2 pad positions
    lengths = jnp.array([8, 6])
    pos = jnp.arange(L)
    non_pad_mask = (pos[None, :] < lengths[:, None]).astype(
        jnp.float32)[:, :, None]                                   # (B, L, 1)
    slf_attn_mask = jnp.broadcast_to(
        (pos[None, None, :] >= lengths[:, None, None]).astype(jnp.float32),
        (B, L, L))                                                 # (B, L, L)

    params = init_params(k_p, d_model, d_inner, n_head, d_k, d_v)

    enc_output, enc_slf_attn = encoder_layer(
        enc_input, non_pad_mask, slf_attn_mask, params,
        n_head=n_head, d_k=d_k, d_v=d_v)
    jax.block_until_ready((enc_output, enc_slf_attn))

    assert enc_output.shape == (B, L, d_model)
    assert enc_slf_attn.shape == (n_head * B, L, L)

    ref_out, ref_attn = _reference(enc_input, non_pad_mask, slf_attn_mask,
                                   params, n_head=n_head, d_k=d_k, d_v=d_v)
    assert float(jnp.max(jnp.abs(enc_output - ref_out))) < 3e-2
    assert float(jnp.max(jnp.abs(enc_slf_attn - ref_attn))) < 3e-2

    print("KERNEL_OK")
</pallas_src>

<mosaic_0001>
module attributes {stable_mosaic.version = 11 : i64} {
  func.func @_encoder_layer_kernel(%arg0: memref<2x8x32xf32, #tpu.memory_space<vmem>>, %arg1: memref<2x8x8xf32, #tpu.memory_space<vmem>>, %arg2: memref<2x8x1xf32, #tpu.memory_space<vmem>>, %arg3: memref<32x96xf32, #tpu.memory_space<vmem>>, %arg4: memref<1x96xf32, #tpu.memory_space<vmem>>, %arg5: memref<32x32xf32, #tpu.memory_space<vmem>>, %arg6: memref<1x32xf32, #tpu.memory_space<vmem>>, %arg7: memref<1x32xf32, #tpu.memory_space<vmem>>, %arg8: memref<1x32xf32, #tpu.memory_space<vmem>>, %arg9: memref<32x64xf32, #tpu.memory_space<vmem>>, %arg10: memref<1x64xf32, #tpu.memory_space<vmem>>, %arg11: memref<64x32xf32, #tpu.memory_space<vmem>>, %arg12: memref<1x32xf32, #tpu.memory_space<vmem>>, %arg13: memref<1x32xf32, #tpu.memory_space<vmem>>, %arg14: memref<1x32xf32, #tpu.memory_space<vmem>>, %arg15: memref<2x8x32xf32, #tpu.memory_space<vmem>>, %arg16: memref<4x2x8x8xf32, #tpu.memory_space<vmem>>) attributes {dimension_semantics = [], scalar_prefetch = 0 : i64, scratch_operands = 0 : i64, tpu.core_type = #tpu.core_type<tc>} {
    %c0 = arith.constant 0 : index
    %c0_0 = arith.constant 0 : index
    %c0_1 = arith.constant 0 : index
    %0 = vector.load %arg0[%c0, %c0_0, %c0_1] : memref<2x8x32xf32, #tpu.memory_space<vmem>>, vector<2x8x32xf32>
    %1 = vector.shape_cast %0 : vector<2x8x32xf32> to vector<16x32xf32>
    %c0_2 = arith.constant 0 : index
    %c0_3 = arith.constant 0 : index
    %c0_4 = arith.constant 0 : index
    %2 = vector.load %arg1[%c0_2, %c0_3, %c0_4] : memref<2x8x8xf32, #tpu.memory_space<vmem>>, vector<2x8x8xf32>
    %c0_5 = arith.constant 0 : index
    %c0_6 = arith.constant 0 : index
    %c0_7 = arith.constant 0 : index
    %3 = vector.load %arg2[%c0_5, %c0_6, %c0_7] : memref<2x8x1xf32, #tpu.memory_space<vmem>>, vector<2x8x1xf32>
    %4 = vector.shape_cast %3 : vector<2x8x1xf32> to vector<16x1xf32>
    %c0_8 = arith.constant 0 : index
    %c0_9 = arith.constant 0 : index
    %5 = vector.load %arg3[%c0_8, %c0_9] : memref<32x96xf32, #tpu.memory_space<vmem>>, vector<32x96xf32>
    %cst = arith.constant dense<0.000000e+00> : vector<16x96xf32>
    %6 = tpu.matmul %1, %5, %cst {dimension_numbers = #tpu.dot_dimension_numbers<[1], [0], [0], [1], [0, 0, 1, 1], [], []>} : vector<16x32xf32>, vector<32x96xf32>, vector<16x96xf32> -> vector<16x96xf32>
    %c0_10 = arith.constant 0 : index
    %c0_11 = arith.constant 0 : index
    %7 = vector.load %arg4[%c0_10, %c0_11] : memref<1x96xf32, #tpu.memory_space<vmem>>, vector<1x96xf32>
    %8 = vector.broadcast %7 : vector<1x96xf32> to vector<16x96xf32>
    %9 = arith.addf %6, %8 : vector<16x96xf32>
    %10 = vector.extract_strided_slice %9 {offsets = [0, 0], sizes = [16, 32], strides = [1, 1]} : vector<16x96xf32> to vector<16x32xf32>
    %cst_12 = arith.constant 0.353553385 : f32
    %11 = vector.broadcast %cst_12 : f32 to vector<16x32xf32>
    %12 = arith.mulf %10, %11 : vector<16x32xf32>
    %13 = vector.shape_cast %12 : vector<16x32xf32> to vector<2x8x32xf32>
    %14 = vector.extract_strided_slice %9 {offsets = [0, 32], sizes = [16, 32], strides = [1, 1]} : vector<16x96xf32> to vector<16x32xf32>
    %15 = vector.shape_cast %14 : vector<16x32xf32> to vector<2x8x32xf32>
    %16 = vector.extract_strided_slice %9 {offsets = [0, 64], sizes = [16, 32], strides = [1, 1]} : vector<16x96xf32> to vector<16x32xf32>
    %17 = vector.shape_cast %16 : vector<16x32xf32> to vector<2x8x32xf32>
    %c0_13 = arith.constant 0 : index
    %c0_14 = arith.constant 0 : index
    %18 = vector.load %arg5[%c0_13, %c0_14] : memref<32x32xf32, #tpu.memory_space<vmem>>, vector<32x32xf32>
    %cst_15 = arith.constant 0.000000e+00 : f32
    %19 = vector.broadcast %cst_15 : f32 to vector<16x32xf32>
    %20 = vector.extract_strided_slice %13 {offsets = [0, 0, 0], sizes = [2, 8, 8], strides = [1, 1, 1]} : vector<2x8x32xf32> to vector<2x8x8xf32>
    %21 = vector.extract_strided_slice %15 {offsets = [0, 0, 0], sizes = [2, 8, 8], strides = [1, 1, 1]} : vector<2x8x32xf32> to vector<2x8x8xf32>
    %22 = vector.extract_strided_slice %17 {offsets = [0, 0, 0], sizes = [2, 8, 8], strides = [1, 1, 1]} : vector<2x8x32xf32> to vector<2x8x8xf32>
    "tpu.trace_start"() <{level = 10 : i32, message = "bqd,bkd->bqk"}> : () -> ()
    %cst_16 = arith.constant dense<0.000000e+00> : vector<2x8x8xf32>
    %23 = tpu.matmul %20, %21, %cst_16 {dimension_numbers = #tpu.dot_dimension_numbers<[2], [2], [1], [1], [0, 0, 0, 1, 1, 1], [0], [0]>} : vector<2x8x8xf32>, vector<2x8x8xf32>, vector<2x8x8xf32> -> vector<2x8x8xf32>
    "tpu.trace_stop"() : () -> ()
    %24 = arith.addf %23, %2 : vector<2x8x8xf32>
    %cst_17 = arith.constant dense<0xFF800000> : vector<2x8xf32>
    %25 = vector.multi_reduction <maximumf>, %24, %cst_17 [2] : vector<2x8x8xf32> to vector<2x8xf32>
    %26 = vector.shape_cast %25 : vector<2x8xf32> to vector<2x8x1xf32>
    %27 = vector.broadcast %26 : vector<2x8x1xf32> to vector<2x8x8xf32>
    %28 = arith.subf %24, %27 : vector<2x8x8xf32>
    %29 = math.exp %28 : vector<2x8x8xf32>
    %cst_18 = arith.constant dense<0.000000e+00> : vector<2x8xf32>
    %30 = vector.multi_reduction <add>, %29, %cst_18 [2] : vector<2x8x8xf32> to vector<2x8xf32>
    %31 = vector.shape_cast %30 : vector<2x8xf32> to vector<2x8x1xf32>
    %32 = vector.broadcast %31 : vector<2x8x1xf32> to vector<2x8x8xf32>
    %33 = arith.divf %29, %32 : vector<2x8x8xf32>
    %c0_19 = arith.constant 0 : index
    %c0_20 = arith.constant 0 : index
    %c0_21 = arith.constant 0 : index
    %c0_22 = arith.constant 0 : index
    %34 = vector.load %arg16[%c0_19, %c0_20, %c0_21, %c0_22] : memref<4x2x8x8xf32, #tpu.memory_space<vmem>>, vector<1x2x8x8xf32>
    %35 = vector.shape_cast %34 : vector<1x2x8x8xf32> to vector<2x8x8xf32>
    %36 = vector.shape_cast %33 : vector<2x8x8xf32> to vector<1x2x8x8xf32>
    tpu.vector_store %arg16[%c0_19, %c0_20, %c0_21, %c0_22], %36 {strides = array<i32>} : memref<4x2x8x8xf32, #tpu.memory_space<vmem>>, vector<1x2x8x8xf32>,
    "tpu.trace_start"() <{level = 10 : i32, message = "bqk,bkd->bqd"}> : () -> ()
    %cst_23 = arith.constant dense<0.000000e+00> : vector<2x8x8xf32>
    %37 = tpu.matmul %33, %22, %cst_23 {dimension_numbers = #tpu.dot_dimension_numbers<[2], [1], [1], [2], [0, 0, 0, 1, 1, 2], [0], [0]>} : vector<2x8x8xf32>, vector<2x8x8xf32>, vector<2x8x8xf32> -> vector<2x8x8xf32>
    "tpu.trace_stop"() : () -> ()
    %38 = vector.shape_cast %37 : vector<2x8x8xf32> to vector<16x8xf32>
    %39 = vector.extract_strided_slice %18 {offsets = [0, 0], sizes = [8, 32], strides = [1, 1]} : vector<32x32xf32> to vector<8x32xf32>
    %cst_24 = arith.constant dense<0.000000e+00> : vector<16x32xf32>
    %40 = tpu.matmul %38, %39, %cst_24 {dimension_numbers = #tpu.dot_dimension_numbers<[1], [0], [0], [1], [0, 0, 1, 1], [], []>} : vector<16x8xf32>, vector<8x32xf32>, vector<16x32xf32> -> vector<16x32xf32>
    %41 = arith.addf %19, %40 : vector<16x32xf32>
    %42 = vector.extract_strided_slice %13 {offsets = [0, 0, 8], sizes = [2, 8, 8], strides = [1, 1, 1]} : vector<2x8x32xf32> to vector<2x8x8xf32>
    %43 = vector.extract_strided_slice %15 {offsets = [0, 0, 8], sizes = [2, 8, 8], strides = [1, 1, 1]} : vector<2x8x32xf32> to vector<2x8x8xf32>
    %44 = vector.extract_strided_slice %17 {offsets = [0, 0, 8], sizes = [2, 8, 8], strides = [1, 1, 1]} : vector<2x8x32xf32> to vector<2x8x8xf32>
    "tpu.trace_start"() <{level = 10 : i32, message = "bqd,bkd->bqk"}> : () -> ()
    %cst_25 = arith.constant dense<0.000000e+00> : vector<2x8x8xf32>
    %45 = tpu.matmul %42, %43, %cst_25 {dimension_numbers = #tpu.dot_dimension_numbers<[2], [2], [1], [1], [0, 0, 0, 1, 1, 1], [0], [0]>} : vector<2x8x8xf32>, vector<2x8x8xf32>, vector<2x8x8xf32> -> vector<2x8x8xf32>
    "tpu.trace_stop"() : () -> ()
    %46 = arith.addf %45, %2 : vector<2x8x8xf32>
    %cst_26 = arith.constant dense<0xFF800000> : vector<2x8xf32>
    %47 = vector.multi_reduction <maximumf>, %46, %cst_26 [2] : vector<2x8x8xf32> to vector<2x8xf32>
    %48 = vector.shape_cast %47 : vector<2x8xf32> to vector<2x8x1xf32>
    %49 = vector.broadcast %48 : vector<2x8x1xf32> to vector<2x8x8xf32>
    %50 = arith.subf %46, %49 : vector<2x8x8xf32>
    %51 = math.exp %50 : vector<2x8x8xf32>
    %cst_27 = arith.constant dense<0.000000e+00> : vector<2x8xf32>
    %52 = vector.multi_reduction <add>, %51, %cst_27 [2] : vector<2x8x8xf32> to vector<2x8xf32>
    %53 = vector.shape_cast %52 : vector<2x8xf32> to vector<2x8x1xf32>
    %54 = vector.broadcast %53 : vector<2x8x1xf32> to vector<2x8x8xf32>
    %55 = arith.divf %51, %54 : vector<2x8x8xf32>
    %c1 = arith.constant 1 : index
    %c0_28 = arith.constant 0 : index
    %c0_29 = arith.constant 0 : index
    %c0_30 = arith.constant 0 : index
    %56 = vector.load %arg16[%c1, %c0_28, %c0_29, %c0_30] : memref<4x2x8x8xf32, #tpu.memory_space<vmem>>, vector<1x2x8x8xf32>
    %57 = vector.shape_cast %56 : vector<1x2x8x8xf32> to vector<2x8x8xf32>
    %58 = vector.shape_cast %55 : vector<2x8x8xf32> to vector<1x2x8x8xf32>
    tpu.vector_store %arg16[%c1, %c0_28, %c0_29, %c0_30], %58 {strides = array<i32>} : memref<4x2x8x8xf32, #tpu.memory_space<vmem>>, vector<1x2x8x8xf32>,
    "tpu.trace_start"() <{level = 10 : i32, message = "bqk,bkd->bqd"}> : () -> ()
    %cst_31 = arith.constant dense<0.000000e+00> : vector<2x8x8xf32>
    %59 = tpu.matmul %55, %44, %cst_31 {dimension_numbers = #tpu.dot_dimension_numbers<[2], [1], [1], [2], [0, 0, 0, 1, 1, 2], [0], [0]>} : vector<2x8x8xf32>, vector<2x8x8xf32>, vector<2x8x8xf32> -> vector<2x8x8xf32>
    "tpu.trace_stop"() : () -> ()
    %60 = vector.shape_cast %59 : vector<2x8x8xf32> to vector<16x8xf32>
    %61 = vector.extract_strided_slice %18 {offsets = [8, 0], sizes = [8, 32], strides = [1, 1]} : vector<32x32xf32> to vector<8x32xf32>
    %cst_32 = arith.constant dense<0.000000e+00> : vector<16x32xf32>
    %62 = tpu.matmul %60, %61, %cst_32 {dimension_numbers = #tpu.dot_dimension_numbers<[1], [0], [0], [1], [0, 0, 1, 1], [], []>} : vector<16x8xf32>, vector<8x32xf32>, vector<16x32xf32> -> vector<16x32xf32>
    %63 = arith.addf %41, %62 : vector<16x32xf32>
    %64 = vector.extract_strided_slice %13 {offsets = [0, 0, 16], sizes = [2, 8, 8], strides = [1, 1, 1]} : vector<2x8x32xf32> to vector<2x8x8xf32>
    %65 = vector.extract_strided_slice %15 {offsets = [0, 0, 16], sizes = [2, 8, 8], strides = [1, 1, 1]} : vector<2x8x32xf32> to vector<2x8x8xf32>
    %66 = vector.extract_strided_slice %17 {offsets = [0, 0, 16], sizes = [2, 8, 8], strides = [1, 1, 1]} : vector<2x8x32xf32> to vector<2x8x8xf32>
    "tpu.trace_start"() <{level = 10 : i32, message = "bqd,bkd->bqk"}> : () -> ()
    %cst_33 = arith.constant dense<0.000000e+00> : vector<2x8x8xf32>
    %67 = tpu.matmul %64, %65, %cst_33 {dimension_numbers = #tpu.dot_dimension_numbers<[2], [2], [1], [1], [0, 0, 0, 1, 1, 1], [0], [0]>} : vector<2x8x8xf32>, vector<2x8x8xf32>, vector<2x8x8xf32> -> vector<2x8x8xf32>
    "tpu.trace_stop"() : () -> ()
    %68 = arith.addf %67, %2 : vector<2x8x8xf32>
    %cst_34 = arith.constant dense<0xFF800000> : vector<2x8xf32>
    %69 = vector.multi_reduction <maximumf>, %68, %cst_34 [2] : vector<2x8x8xf32> to vector<2x8xf32>
    %70 = vector.shape_cast %69 : vector<2x8xf32> to vector<2x8x1xf32>
    %71 = vector.broadcast %70 : vector<2x8x1xf32> to vector<2x8x8xf32>
    %72 = arith.subf %68, %71 : vector<2x8x8xf32>
    %73 = math.exp %72 : vector<2x8x8xf32>
    %cst_35 = arith.constant dense<0.000000e+00> : vector<2x8xf32>
    %74 = vector.multi_reduction <add>, %73, %cst_35 [2] : vector<2x8x8xf32> to vector<2x8xf32>
    %75 = vector.shape_cast %74 : vector<2x8xf32> to vector<2x8x1xf32>
    %76 = vector.broadcast %75 : vector<2x8x1xf32> to vector<2x8x8xf32>
    %77 = arith.divf %73, %76 : vector<2x8x8xf32>
    %c2 = arith.constant 2 : index
    %c0_36 = arith.constant 0 : index
    %c0_37 = arith.constant 0 : index
    %c0_38 = arith.constant 0 : index
    %78 = vector.load %arg16[%c2, %c0_36, %c0_37, %c0_38] : memref<4x2x8x8xf32, #tpu.memory_space<vmem>>, vector<1x2x8x8xf32>
    %79 = vector.shape_cast %78 : vector<1x2x8x8xf32> to vector<2x8x8xf32>
    %80 = vector.shape_cast %77 : vector<2x8x8xf32> to vector<1x2x8x8xf32>
    tpu.vector_store %arg16[%c2, %c0_36, %c0_37, %c0_38], %80 {strides = array<i32>} : memref<4x2x8x8xf32, #tpu.memory_space<vmem>>, vector<1x2x8x8xf32>,
    "tpu.trace_start"() <{level = 10 : i32, message = "bqk,bkd->bqd"}> : () -> ()
    %cst_39 = arith.constant dense<0.000000e+00> : vector<2x8x8xf32>
    %81 = tpu.matmul %77, %66, %cst_39 {dimension_numbers = #tpu.dot_dimension_numbers<[2], [1], [1], [2], [0, 0, 0, 1, 1, 2], [0], [0]>} : vector<2x8x8xf32>, vector<2x8x8xf32>, vector<2x8x8xf32> -> vector<2x8x8xf32>
    "tpu.trace_stop"() : () -> ()
    %82 = vector.shape_cast %81 : vector<2x8x8xf32> to vector<16x8xf32>
    %83 = vector.extract_strided_slice %18 {offsets = [16, 0], sizes = [8, 32], strides = [1, 1]} : vector<32x32xf32> to vector<8x32xf32>
    %cst_40 = arith.constant dense<0.000000e+00> : vector<16x32xf32>
    %84 = tpu.matmul %82, %83, %cst_40 {dimension_numbers = #tpu.dot_dimension_numbers<[1], [0], [0], [1], [0, 0, 1, 1], [], []>} : vector<16x8xf32>, vector<8x32xf32>, vector<16x32xf32> -> vector<16x32xf32>
    %85 = arith.addf %63, %84 : vector<16x32xf32>
    %86 = vector.extract_strided_slice %13 {offsets = [0, 0, 24], sizes = [2, 8, 8], strides = [1, 1, 1]} : vector<2x8x32xf32> to vector<2x8x8xf32>
    %87 = vector.extract_strided_slice %15 {offsets = [0, 0, 24], sizes = [2, 8, 8], strides = [1, 1, 1]} : vector<2x8x32xf32> to vector<2x8x8xf32>
    %88 = vector.extract_strided_slice %17 {offsets = [0, 0, 24], sizes = [2, 8, 8], strides = [1, 1, 1]} : vector<2x8x32xf32> to vector<2x8x8xf32>
    "tpu.trace_start"() <{level = 10 : i32, message = "bqd,bkd->bqk"}> : () -> ()
    %cst_41 = arith.constant dense<0.000000e+00> : vector<2x8x8xf32>
    %89 = tpu.matmul %86, %87, %cst_41 {dimension_numbers = #tpu.dot_dimension_numbers<[2], [2], [1], [1], [0, 0, 0, 1, 1, 1], [0], [0]>} : vector<2x8x8xf32>, vector<2x8x8xf32>, vector<2x8x8xf32> -> vector<2x8x8xf32>
    "tpu.trace_stop"() : () -> ()
    %90 = arith.addf %89, %2 : vector<2x8x8xf32>
    %cst_42 = arith.constant dense<0xFF800000> : vector<2x8xf32>
    %91 = vector.multi_reduction <maximumf>, %90, %cst_42 [2] : vector<2x8x8xf32> to vector<2x8xf32>
    %92 = vector.shape_cast %91 : vector<2x8xf32> to vector<2x8x1xf32>
    %93 = vector.broadcast %92 : vector<2x8x1xf32> to vector<2x8x8xf32>
    %94 = arith.subf %90, %93 : vector<2x8x8xf32>
    %95 = math.exp %94 : vector<2x8x8xf32>
    %cst_43 = arith.constant dense<0.000000e+00> : vector<2x8xf32>
    %96 = vector.multi_reduction <add>, %95, %cst_43 [2] : vector<2x8x8xf32> to vector<2x8xf32>
    %97 = vector.shape_cast %96 : vector<2x8xf32> to vector<2x8x1xf32>
    %98 = vector.broadcast %97 : vector<2x8x1xf32> to vector<2x8x8xf32>
    %99 = arith.divf %95, %98 : vector<2x8x8xf32>
    %c3 = arith.constant 3 : index
    %c0_44 = arith.constant 0 : index
    %c0_45 = arith.constant 0 : index
    %c0_46 = arith.constant 0 : index
    %100 = vector.load %arg16[%c3, %c0_44, %c0_45, %c0_46] : memref<4x2x8x8xf32, #tpu.memory_space<vmem>>, vector<1x2x8x8xf32>
    %101 = vector.shape_cast %100 : vector<1x2x8x8xf32> to vector<2x8x8xf32>
    %102 = vector.shape_cast %99 : vector<2x8x8xf32> to vector<1x2x8x8xf32>
    tpu.vector_store %arg16[%c3, %c0_44, %c0_45, %c0_46], %102 {strides = array<i32>} : memref<4x2x8x8xf32, #tpu.memory_space<vmem>>, vector<1x2x8x8xf32>,
    "tpu.trace_start"() <{level = 10 : i32, message = "bqk,bkd->bqd"}> : () -> ()
    %cst_47 = arith.constant dense<0.000000e+00> : vector<2x8x8xf32>
    %103 = tpu.matmul %99, %88, %cst_47 {dimension_numbers = #tpu.dot_dimension_numbers<[2], [1], [1], [2], [0, 0, 0, 1, 1, 2], [0], [0]>} : vector<2x8x8xf32>, vector<2x8x8xf32>, vector<2x8x8xf32> -> vector<2x8x8xf32>
    "tpu.trace_stop"() : () -> ()
    %104 = vector.shape_cast %103 : vector<2x8x8xf32> to vector<16x8xf32>
    %105 = vector.extract_strided_slice %18 {offsets = [24, 0], sizes = [8, 32], strides = [1, 1]} : vector<32x32xf32> to vector<8x32xf32>
    %cst_48 = arith.constant dense<0.000000e+00> : vector<16x32xf32>
    %106 = tpu.matmul %104, %105, %cst_48 {dimension_numbers = #tpu.dot_dimension_numbers<[1], [0], [0], [1], [0, 0, 1, 1], [], []>} : vector<16x8xf32>, vector<8x32xf32>, vector<16x32xf32> -> vector<16x32xf32>
    %107 = arith.addf %85, %106 : vector<16x32xf32>
    %c0_49 = arith.constant 0 : index
    %c0_50 = arith.constant 0 : index
    %108 = vector.load %arg6[%c0_49, %c0_50] : memref<1x32xf32, #tpu.memory_space<vmem>>, vector<1x32xf32>
    %109 = vector.broadcast %108 : vector<1x32xf32> to vector<16x32xf32>
    %110 = arith.addf %107, %109 : vector<16x32xf32>
    %111 = arith.addf %110, %1 : vector<16x32xf32>
    %cst_51 = arith.constant dense<0.000000e+00> : vector<16xf32>
    %112 = vector.multi_reduction <add>, %111, %cst_51 [1] : vector<16x32xf32> to vector<16xf32>
    %113 = vector.shape_cast %112 : vector<16xf32> to vector<16x1xf32>
    %cst_52 = arith.constant 3.200000e+01 : f32
    %114 = vector.broadcast %cst_52 : f32 to vector<16x1xf32>
    %115 = arith.divf %113, %114 : vector<16x1xf32>
    %116 = vector.broadcast %115 : vector<16x1xf32> to vector<16x32xf32>
    %117 = arith.subf %111, %116 : vector<16x32xf32>
    %118 = arith.mulf %117, %117 : vector<16x32xf32>
    %cst_53 = arith.constant dense<0.000000e+00> : vector<16xf32>
    %119 = vector.multi_reduction <add>, %118, %cst_53 [1] : vector<16x32xf32> to vector<16xf32>
    %120 = vector.shape_cast %119 : vector<16xf32> to vector<16x1xf32>
    %cst_54 = arith.constant 3.200000e+01 : f32
    %121 = vector.broadcast %cst_54 : f32 to vector<16x1xf32>
    %122 = arith.divf %120, %121 : vector<16x1xf32>
    %123 = vector.broadcast %115 : vector<16x1xf32> to vector<16x32xf32>
    %124 = arith.subf %111, %123 : vector<16x32xf32>
    %cst_55 = arith.constant 9.99999974E-6 : f32
    %125 = vector.broadcast %cst_55 : f32 to vector<16x1xf32>
    %126 = arith.addf %122, %125 : vector<16x1xf32>
    %127 = math.rsqrt %126 : vector<16x1xf32>
    %128 = vector.broadcast %127 : vector<16x1xf32> to vector<16x32xf32>
    %129 = arith.mulf %124, %128 : vector<16x32xf32>
    %c0_56 = arith.constant 0 : index
    %c0_57 = arith.constant 0 : index
    %130 = vector.load %arg7[%c0_56, %c0_57] : memref<1x32xf32, #tpu.memory_space<vmem>>, vector<1x32xf32>
    %131 = vector.broadcast %130 : vector<1x32xf32> to vector<16x32xf32>
    %132 = arith.mulf %129, %131 : vector<16x32xf32>
    %c0_58 = arith.constant 0 : index
    %c0_59 = arith.constant 0 : index
    %133 = vector.load %arg8[%c0_58, %c0_59] : memref<1x32xf32, #tpu.memory_space<vmem>>, vector<1x32xf32>
    %134 = vector.broadcast %133 : vector<1x32xf32> to vector<16x32xf32>
    %135 = arith.addf %132, %134 : vector<16x32xf32>
    %136 = vector.broadcast %4 : vector<16x1xf32> to vector<16x32xf32>
    %137 = arith.mulf %135, %136 : vector<16x32xf32>
    %c0_60 = arith.constant 0 : index
    %c0_61 = arith.constant 0 : index
    %138 = vector.load %arg9[%c0_60, %c0_61] : memref<32x64xf32, #tpu.memory_space<vmem>>, vector<32x64xf32>
    %cst_62 = arith.constant dense<0.000000e+00> : vector<16x64xf32>
    %139 = tpu.matmul %137, %138, %cst_62 {dimension_numbers = #tpu.dot_dimension_numbers<[1], [0], [0], [1], [0, 0, 1, 1], [], []>} : vector<16x32xf32>, vector<32x64xf32>, vector<16x64xf32> -> vector<16x64xf32>
    %c0_63 = arith.constant 0 : index
    %c0_64 = arith.constant 0 : index
    %140 = vector.load %arg10[%c0_63, %c0_64] : memref<1x64xf32, #tpu.memory_space<vmem>>, vector<1x64xf32>
    %141 = vector.broadcast %140 : vector<1x64xf32> to vector<16x64xf32>
    %142 = arith.addf %139, %141 : vector<16x64xf32>
    %cst_65 = arith.constant 0.000000e+00 : f32
    %143 = vector.broadcast %cst_65 : f32 to vector<16x64xf32>
    %144 = arith.maximumf %142, %143 : vector<16x64xf32>
    %c0_66 = arith.constant 0 : index
    %c0_67 = arith.constant 0 : index
    %145 = vector.load %arg11[%c0_66, %c0_67] : memref<64x32xf32, #tpu.memory_space<vmem>>, vector<64x32xf32>
    %cst_68 = arith.constant dense<0.000000e+00> : vector<16x32xf32>
    %146 = tpu.matmul %144, %145, %cst_68 {dimension_numbers = #tpu.dot_dimension_numbers<[1], [0], [0], [1], [0, 0, 1, 1], [], []>} : vector<16x64xf32>, vector<64x32xf32>, vector<16x32xf32> -> vector<16x32xf32>
    %c0_69 = arith.constant 0 : index
    %c0_70 = arith.constant 0 : index
    %147 = vector.load %arg12[%c0_69, %c0_70] : memref<1x32xf32, #tpu.memory_space<vmem>>, vector<1x32xf32>
    %148 = vector.broadcast %147 : vector<1x32xf32> to vector<16x32xf32>
    %149 = arith.addf %146, %148 : vector<16x32xf32>
    %150 = arith.addf %149, %137 : vector<16x32xf32>
    %cst_71 = arith.constant dense<0.000000e+00> : vector<16xf32>
    %151 = vector.multi_reduction <add>, %150, %cst_71 [1] : vector<16x32xf32> to vector<16xf32>
    %152 = vector.shape_cast %151 : vector<16xf32> to vector<16x1xf32>
    %cst_72 = arith.constant 3.200000e+01 : f32
    %153 = vector.broadcast %cst_72 : f32 to vector<16x1xf32>
    %154 = arith.divf %152, %153 : vector<16x1xf32>
    %155 = vector.broadcast %154 : vector<16x1xf32> to vector<16x32xf32>
    %156 = arith.subf %150, %155 : vector<16x32xf32>
    %157 = arith.mulf %156, %156 : vector<16x32xf32>
    %cst_73 = arith.constant dense<0.000000e+00> : vector<16xf32>
    %158 = vector.multi_reduction <add>, %157, %cst_73 [1] : vector<16x32xf32> to vector<16xf32>
    %159 = vector.shape_cast %158 : vector<16xf32> to vector<16x1xf32>
    %cst_74 = arith.constant 3.200000e+01 : f32
    %160 = vector.broadcast %cst_74 : f32 to vector<16x1xf32>
    %161 = arith.divf %159, %160 : vector<16x1xf32>
    %162 = vector.broadcast %154 : vector<16x1xf32> to vector<16x32xf32>
    %163 = arith.subf %150, %162 : vector<16x32xf32>
    %cst_75 = arith.constant 9.99999974E-6 : f32
    %164 = vector.broadcast %cst_75 : f32 to vector<16x1xf32>
    %165 = arith.addf %161, %164 : vector<16x1xf32>
    %166 = math.rsqrt %165 : vector<16x1xf32>
    %167 = vector.broadcast %166 : vector<16x1xf32> to vector<16x32xf32>
    %168 = arith.mulf %163, %167 : vector<16x32xf32>
    %c0_76 = arith.constant 0 : index
    %c0_77 = arith.constant 0 : index
    %169 = vector.load %arg13[%c0_76, %c0_77] : memref<1x32xf32, #tpu.memory_space<vmem>>, vector<1x32xf32>
    %170 = vector.broadcast %169 : vector<1x32xf32> to vector<16x32xf32>
    %171 = arith.mulf %168, %170 : vector<16x32xf32>
    %c0_78 = arith.constant 0 : index
    %c0_79 = arith.constant 0 : index
    %172 = vector.load %arg14[%c0_78, %c0_79] : memref<1x32xf32, #tpu.memory_space<vmem>>, vector<1x32xf32>
    %173 = vector.broadcast %172 : vector<1x32xf32> to vector<16x32xf32>
    %174 = arith.addf %171, %173 : vector<16x32xf32>
    %175 = vector.broadcast %4 : vector<16x1xf32> to vector<16x32xf32>
    %176 = arith.mulf %174, %175 : vector<16x32xf32>
    %177 = vector.shape_cast %176 : vector<16x32xf32> to vector<2x8x32xf32>
    %c0_80 = arith.constant 0 : index
    %c0_81 = arith.constant 0 : index
    %c0_82 = arith.constant 0 : index
    %178 = vector.load %arg15[%c0_80, %c0_81, %c0_82] : memref<2x8x32xf32, #tpu.memory_space<vmem>>, vector<2x8x32xf32>
    tpu.vector_store %arg15[%c0_80, %c0_81, %c0_82], %177 {strides = array<i32>} : memref<2x8x32xf32, #tpu.memory_space<vmem>>, vector<2x8x32xf32>,
    return
  }
}

</mosaic_0001>

<llo_original>
// kernel: tpu_custom_call.1
$region0: #{tpu_custom_call.1}
  #allocation0 [shape = 'u32[]', space=smem, size = 0x4, offset = 0x4, fixed_abs, tag = 'smem constant byte address 0x4 - core index']
  #allocation1 [shape = 'u32[144,128]{1,0:T(1,128)}', space=vmem, size = 0x12000, scoped, tag = 'internal scratch']
  %s0 = inlined_call_operand.vmem [shape: f32[2,8,32], index: 0, kind: input, shape index: {}]
  %s1 = inlined_call_operand.hbm [shape: f32[2,8,8], index: 1, kind: input, shape index: {}]
  %s2 = inlined_call_operand.vmem [shape: f32[2,8,1], index: 2, kind: input, shape index: {}]
  %s3 = inlined_call_operand.vmem [shape: f32[32,96], index: 3, kind: input, shape index: {}]
  %s4 = inlined_call_operand.vmem [shape: f32[1,96], index: 4, kind: input, shape index: {}]
  %s5 = inlined_call_operand.vmem [shape: f32[32,32], index: 5, kind: input, shape index: {}]
  %s6 = inlined_call_operand.vmem [shape: f32[1,32], index: 6, kind: input, shape index: {}]
  %s7 = inlined_call_operand.vmem [shape: f32[1,32], index: 7, kind: input, shape index: {}]
  %s8 = inlined_call_operand.vmem [shape: f32[1,32], index: 8, kind: input, shape index: {}]
  %s9 = inlined_call_operand.vmem [shape: f32[32,64], index: 9, kind: input, shape index: {}]
  %s10 = inlined_call_operand.vmem [shape: f32[1,64], index: 10, kind: input, shape index: {}]
  %s11 = inlined_call_operand.vmem [shape: f32[64,32], index: 11, kind: input, shape index: {}]
  %s12 = inlined_call_operand.vmem [shape: f32[1,32], index: 12, kind: input, shape index: {}]
  %s13 = inlined_call_operand.vmem [shape: f32[1,32], index: 13, kind: input, shape index: {}]
  %s14 = inlined_call_operand.vmem [shape: f32[1,32], index: 14, kind: input, shape index: {}]
  %s15 = inlined_call_operand.hbm [shape: f32[2,8,32], index: 15, kind: output, shape index: {0}]
  %s16 = inlined_call_operand.hbm [shape: f32[4,2,8,8], index: 16, kind: output, shape index: {1}]
  %17 = xla_tuple %s15, %s16
  %s18 = sld [smem:[#allocation0]]
  $region82: #{tpu_custom_call.1} parent=0
    _
  %s20 = ssub.s32 1, %s18
  %s21 = scalar_select 0, %s20, %s18
  $region1: #{tpu_custom_call.1} parent=0
    #allocation2 [shape = 'u8[8192]{0}', space=vmem, size = 0x2000, scoped, tag = 'input window, operand 1, single buffered']
    #allocation3 [shape = 's32[1]{0}', space=sflag, size = 0x4, scoped, tag = 'scoped memory for tpu_custom_call.1']
    #allocation4 [shape = 's32[1]{0}', space=sflag, size = 0x4, scoped, tag = 'scoped memory for tpu_custom_call.1']
    #allocation5 [shape = 'u8[8192]{0}', space=vmem, size = 0x2000, scoped, tag = 'output window, operand 0, single buffered']
    #allocation6 [shape = 'u8[32768]{0}', space=vmem, size = 0x8000, scoped, tag = 'output window, operand 1, single buffered']
    #allocation7 [shape = 's32[1]{0}', space=sflag, size = 0x4, scoped, tag = 'scoped memory for tpu_custom_call.1']
    %22 = vsyncpa [#allocation3], 0
    %23 = vsyncpa [#allocation4], 0
    %24 = vsyncpa [#allocation7], 0
    // Predicated region
    $region2: #{tpu_custom_call.1} parent=1 // pred_check
      _
    $region3: #{tpu_custom_call.1} parent=1 // pred_check_branch
      %26 = sbr.rel (0) target = $region5
    $region4: #{tpu_custom_call.1} parent=1 // pred_region
      _
    $region5: #{tpu_custom_call.1} parent=1 // pred_fallthru
      _
    // Predicated region
    $region6: #{tpu_custom_call.1} parent=1 // pred_check
      _
    $region7: #{tpu_custom_call.1} parent=1 // pred_check_branch
      %28 = sbr.rel (0) target = $region9
    $region8: #{tpu_custom_call.1} parent=1 // pred_region
      %s30 = ssub.s32 256, 256
      %31 = vsyncadd [#allocation3], %s30
      %s32 = sshll.u32 [#allocation2], 4
      %s33 = int_to_ptr.vmem [resolvable:$true] %s32
      %38 = dma.hbm_to_vmem [thread:$0]  %s1, 256, %s33, [#allocation3], 128, 128, 8
    $region9: #{tpu_custom_call.1} parent=1 // pred_fallthru
      _
    // Predicated region
    $region10: #{tpu_custom_call.1} parent=1 // pred_check
      _
    $region11: #{tpu_custom_call.1} parent=1 // pred_check_branch
      %40 = sbr.rel (0) target = $region13
    $region12: #{tpu_custom_call.1} parent=1 // pred_region
      _
    $region13: #{tpu_custom_call.1} parent=1 // pred_fallthru
      _
    // Predicated region
    $region14: #{tpu_custom_call.1} parent=1 // pred_check
      _
    $region15: #{tpu_custom_call.1} parent=1 // pred_check_branch
      %42 = sbr.rel (0) target = $region17
    $region16: #{tpu_custom_call.1} parent=1 // pred_region
      _
    $region17: #{tpu_custom_call.1} parent=1 // pred_fallthru
      _
    // Predicated region
    $region18: #{tpu_custom_call.1} parent=1 // pred_check
      _
    $region19: #{tpu_custom_call.1} parent=1 // pred_check_branch
      %44 = sbr.rel (0) target = $region21
    $region20: #{tpu_custom_call.1} parent=1 // pred_region
      _
    $region21: #{tpu_custom_call.1} parent=1 // pred_fallthru
      _
    // Predicated region
    $region22: #{tpu_custom_call.1} parent=1 // pred_check
      _
    $region23: #{tpu_custom_call.1} parent=1 // pred_check_branch
      %46 = sbr.rel (0) target = $region25
    $region24: #{tpu_custom_call.1} parent=1 // pred_region
      _
    $region25: #{tpu_custom_call.1} parent=1 // pred_fallthru
      _
    // Predicated region
    $region26: #{tpu_custom_call.1} parent=1 // pred_check
      _
    $region27: #{tpu_custom_call.1} parent=1 // pred_check_branch
      %48 = sbr.rel (0) target = $region29
    $region28: #{tpu_custom_call.1} parent=1 // pred_region
      _
    $region29: #{tpu_custom_call.1} parent=1 // pred_fallthru
      _
    // Predicated region
    $region30: #{tpu_custom_call.1} parent=1 // pred_check
      _
    $region31: #{tpu_custom_call.1} parent=1 // pred_check_branch
      %50 = sbr.rel (0) target = $region33
    $region32: #{tpu_custom_call.1} parent=1 // pred_region
      _
    $region33: #{tpu_custom_call.1} parent=1 // pred_fallthru
      _
    // Predicated region
    $region34: #{tpu_custom_call.1} parent=1 // pred_check
      _
    $region35: #{tpu_custom_call.1} parent=1 // pred_check_branch
      %52 = sbr.rel (0) target = $region37
    $region36: #{tpu_custom_call.1} parent=1 // pred_region
      _
    $region37: #{tpu_custom_call.1} parent=1 // pred_fallthru
      _
    // Predicated region
    $region38: #{tpu_custom_call.1} parent=1 // pred_check
      _
    $region39: #{tpu_custom_call.1} parent=1 // pred_check_branch
      %54 = sbr.rel (0) target = $region41
    $region40: #{tpu_custom_call.1} parent=1 // pred_region
      _
    $region41: #{tpu_custom_call.1} parent=1 // pred_fallthru
      _
    // Predicated region
    $region42: #{tpu_custom_call.1} parent=1 // pred_check
      _
    $region43: #{tpu_custom_call.1} parent=1 // pred_check_branch
      %56 = sbr.rel (0) target = $region45
    $region44: #{tpu_custom_call.1} parent=1 // pred_region
      _
    $region45: #{tpu_custom_call.1} parent=1 // pred_fallthru
      _
    // Predicated region
    $region46: #{tpu_custom_call.1} parent=1 // pred_check
      _
    $region47: #{tpu_custom_call.1} parent=1 // pred_check_branch
      %58 = sbr.rel (0) target = $region49
    $region48: #{tpu_custom_call.1} parent=1 // pred_region
      _
    $region49: #{tpu_custom_call.1} parent=1 // pred_fallthru
      _
    // Predicated region
    $region50: #{tpu_custom_call.1} parent=1 // pred_check
      _
    $region51: #{tpu_custom_call.1} parent=1 // pred_check_branch
      %60 = sbr.rel (0) target = $region53
    $region52: #{tpu_custom_call.1} parent=1 // pred_region
      _
    $region53: #{tpu_custom_call.1} parent=1 // pred_fallthru
      _
    // Predicated region
    $region54: #{tpu_custom_call.1} parent=1 // pred_check
      _
    $region55: #{tpu_custom_call.1} parent=1 // pred_check_branch
      %62 = sbr.rel (0) target = $region57
    $region56: #{tpu_custom_call.1} parent=1 // pred_region
      _
    $region57: #{tpu_custom_call.1} parent=1 // pred_fallthru
      _
    // Predicated region
    $region58: #{tpu_custom_call.1} parent=1 // pred_check
      _
    $region59: #{tpu_custom_call.1} parent=1 // pred_check_branch
      %64 = sbr.rel (0) target = $region61
    $region60: #{tpu_custom_call.1} parent=1 // pred_region
      _
    $region61: #{tpu_custom_call.1} parent=1 // pred_fallthru
      _
    // Predicated region
    $region62: #{tpu_custom_call.1} parent=1 // pred_check
      _
    $region63: #{tpu_custom_call.1} parent=1 // pred_check_branch
      %66 = sbr.rel (0) target = $region65
    $region64: #{tpu_custom_call.1} parent=1 // pred_region
      %67 = dma.done [#allocation3], 256
    $region65: #{tpu_custom_call.1} parent=1 // pred_fallthru
      _
    %v68 = vld [vmem:[%s0] sm:$0xff]
    %v69 = vld [vmem:[%s0 + $0x8] sm:$0xff]
    %v70 = vld [vmem:[#allocation2] sm:$0xff]
    %v71 = vld [vmem:[#allocation2 + $0x8] sm:$0xff]
    %v72 = vld [vmem:[%s2] sm:$0xff]
    %v73 = vld [vmem:[%s2 + $0x8] sm:$0xff]
    %v74 = vld [vmem:[%s3] sm:$0xff]
    %v75 = vld [vmem:[%s3 + $0x8] sm:$0xff]
    %v76 = vld [vmem:[%s3 + $0x10] sm:$0xff]
    %v77 = vld [vmem:[%s3 + $0x18] sm:$0xff]
    %v78 = vld [vmem:[%s4] sm:$0x1]
    %v80 = vlaneseq
    %v81 = vshrl.u32 %v80, 7
    %v82 = vsub.s32 0, %v81
    %v83 = vrot.slane %v78, %v82
    %vm85 = vcmask 261120
    %v87 = vsel %vm85, %v68, 0
    %v90 = vsel %vm85, %v69, 0
    %92 = vmatprep.subr.mxu0 0.0
    %93 = vmatpush1.msra.mxu0 %v74
    %94 = vmatprep.subr.mxu0 0.0
    %95 = vmatpush1.msra.mxu0 %v75
    %96 = vmatprep.subr.mxu0 0.0
    %97 = vmatpush1.msra.mxu0 %v76
    %98 = vmatprep.subr.mxu0 0.0
    %99 = vmatpush1.msra.mxu0 %v77
    %100 = vmatprep.subr.mxu0 0.0
    %101 = vmatpush1.msra.mxu0 0.0
    %102 = vmatprep.subr.mxu0 0.0
    %103 = vmatpush1.msra.mxu0 0.0
    %104 = vmatprep.subr.mxu0 0.0
    %105 = vmatpush1.msra.mxu0 0.0
    %106 = vmatprep.subr.mxu0 0.0
    %107 = vmatpush1.msra.mxu0 0.0
    %108 = vmatprep.subr.mxu0 0.0
    %109 = vmatpush1.msra.mxu0 0.0
    %110 = vmatprep.subr.mxu0 0.0
    %111 = vmatpush1.msra.mxu0 0.0
    %112 = vmatprep.subr.mxu0 0.0
    %113 = vmatpush1.msra.mxu0 0.0
    %114 = vmatprep.subr.mxu0 0.0
    %115 = vmatpush1.msra.mxu0 0.0
    %116 = vmatprep.subr.mxu0 0.0
    %117 = vmatpush1.msra.mxu0 0.0
    %118 = vmatprep.subr.mxu0 0.0
    %119 = vmatpush1.msra.mxu0 0.0
    %120 = vmatprep.subr.mxu0 0.0
    %121 = vmatpush1.msra.mxu0 0.0
    %122 = vmatprep.subr.mxu0 0.0
    %123 = vmatpush1.msra.mxu0 0.0
    %124 = vmatprep.subr.mxu0 0.0
    %125 = vmatpush1.msra.mxu0 0.0
    %126 = vmatprep.subr.mxu0 0.0
    %127 = vmatpush1.msra.mxu0 0.0
    %128 = vmatprep.subr.mxu0 0.0
    %129 = vmatpush1.msra.mxu0 0.0
    %130 = vmatprep.subr.mxu0 0.0
    %131 = vmatpush1.msra.mxu0 0.0
    %132 = vmatprep.subr.mxu0 0.0
    %133 = vmatpush1.msra.mxu0 0.0
    %134 = vmatprep.subr.mxu0 0.0
    %135 = vmatpush1.msra.mxu0 0.0
    %136 = vmatprep.subr.mxu0 0.0
    %137 = vmatpush1.msra.mxu0 0.0
    %138 = vmatprep.subr.mxu0 0.0
    %139 = vmatpush1.msra.mxu0 0.0
    %140 = vmatprep.subr.mxu0 0.0
    %141 = vmatpush1.msra.mxu0 0.0
    %142 = vmatprep.subr.mxu0 0.0
    %143 = vmatpush1.msra.mxu0 0.0
    %144 = vmatprep.subr.mxu0 0.0
    %145 = vmatpush1.msra.mxu0 0.0
    %146 = vmatprep.subr.mxu0 0.0
    %147 = vmatpush1.msra.mxu0 0.0
    %148 = vmatprep.subr.mxu0 0.0
    %149 = vmatpush1.msra.mxu0 0.0
    %150 = vmatprep.subr.mxu0 0.0
    %151 = vmatpush1.msra.mxu0 0.0
    %152 = vmatprep.subr.mxu0 0.0
    %153 = vmatpush1.msra.mxu0 0.0
    %154 = vmatprep.subr.mxu0 0.0
    %155 = vmatpush1.msra.mxu0 0.0
    %156 = vmatprep.mubr.f32.mxu0 0.0
    %157 = vmatmul.mubr.f32.gmra.mrb[0].mxu0 %v87
    %v158 = vpop.f32.mrb[0].mxu0
    %v159 = vadd.f32 %v83, %v158
    %v160 = vpop.f32.mrb[0].mxu0
    %161 = vmatprep.mubr.f32.mxu0 0.0
    %162 = vmatmul.mubr.f32.gmra.mrb[0].mxu0 %v90
    %v163 = vpop.f32.mrb[0].mxu0
    %v164 = vadd.f32 %v83, %v163
    %v165 = vpop.f32.mrb[0].mxu0
    %166 = vdwg.mxu0
    %v167 = vmul.f32 %v159, 0.35355338
    %v168 = vmul.f32 %v164, 0.35355338
    %v169 = vld [vmem:[%s5] sm:$0xff]
    %v170 = vld [vmem:[%s5 + $0x8] sm:$0xff]
    %v171 = vld [vmem:[%s5 + $0x10] sm:$0xff]
    %v172 = vld [vmem:[%s5 + $0x18] sm:$0xff]
    %174 = vrot.lane.b32.xlu0 %v159, 96
    %v175 = vpop.permute.xlu0 %174
    %vm176 = vcmask 64512
    %v178 = vsel %vm176, %v167, 0
    %v180 = vsel %vm176, %v175, 0
    %182 = vmatprep.subr.mxu0 0.0
    %183 = vmatpush1.xpose.msra.mxu0 %v180
    %184 = vmatprep.subr.mxu0 0.0
    %185 = vmatpush1.xpose.msra.mxu0 0.0
    %186 = vmatprep.subr.mxu0 0.0
    %187 = vmatpush1.xpose.msra.mxu0 0.0
    %188 = vmatprep.subr.mxu0 0.0
    %189 = vmatpush1.xpose.msra.mxu0 0.0
    %190 = vmatprep.subr.mxu0 0.0
    %191 = vmatpush1.xpose.msra.mxu0 0.0
    %192 = vmatprep.subr.mxu0 0.0
    %193 = vmatpush1.xpose.msra.mxu0 0.0
    %194 = vmatprep.subr.mxu0 0.0
    %195 = vmatpush1.xpose.msra.mxu0 0.0
    %196 = vmatprep.subr.mxu0 0.0
    %197 = vmatpush1.xpose.msra.mxu0 0.0
    %198 = vmatprep.subr.mxu0 0.0
    %199 = vmatpush1.xpose.msra.mxu0 0.0
    %200 = vmatprep.subr.mxu0 0.0
    %201 = vmatpush1.xpose.msra.mxu0 0.0
    %202 = vmatprep.subr.mxu0 0.0
    %203 = vmatpush1.xpose.msra.mxu0 0.0
    %204 = vmatprep.subr.mxu0 0.0
    %205 = vmatpush1.xpose.msra.mxu0 0.0
    %206 = vmatprep.subr.mxu0 0.0
    %207 = vmatpush1.xpose.msra.mxu0 0.0
    %208 = vmatprep.subr.mxu0 0.0
    %209 = vmatpush1.xpose.msra.mxu0 0.0
    %210 = vmatprep.subr.mxu0 0.0
    %211 = vmatpush1.xpose.msra.mxu0 0.0
    %212 = vmatprep.subr.mxu0 0.0
    %213 = vmatpush1.xpose.msra.mxu0 0.0
    %214 = vmatprep.subr.mxu0 0.0
    %215 = vmatpush1.xpose.msra.mxu0 0.0
    %216 = vmatprep.subr.mxu0 0.0
    %217 = vmatpush1.xpose.msra.mxu0 0.0
    %218 = vmatprep.subr.mxu0 0.0
    %219 = vmatpush1.xpose.msra.mxu0 0.0
    %220 = vmatprep.subr.mxu0 0.0
    %221 = vmatpush1.xpose.msra.mxu0 0.0
    %222 = vmatprep.subr.mxu0 0.0
    %223 = vmatpush1.xpose.msra.mxu0 0.0
    %224 = vmatprep.subr.mxu0 0.0
    %225 = vmatpush1.xpose.msra.mxu0 0.0
    %226 = vmatprep.subr.mxu0 0.0
    %227 = vmatpush1.xpose.msra.mxu0 0.0
    %228 = vmatprep.subr.mxu0 0.0
    %229 = vmatpush1.xpose.msra.mxu0 0.0
    %230 = vmatprep.subr.mxu0 0.0
    %231 = vmatpush1.xpose.msra.mxu0 0.0
    %232 = vmatprep.subr.mxu0 0.0
    %233 = vmatpush1.xpose.msra.mxu0 0.0
    %234 = vmatprep.subr.mxu0 0.0
    %235 = vmatpush1.xpose.msra.mxu0 0.0
    %236 = vmatprep.subr.mxu0 0.0
    %237 = vmatpush1.xpose.msra.mxu0 0.0
    %238 = vmatprep.subr.mxu0 0.0
    %239 = vmatpush1.xpose.msra.mxu0 0.0
    %240 = vmatprep.subr.mxu0 0.0
    %241 = vmatpush1.xpose.msra.mxu0 0.0
    %242 = vmatprep.subr.mxu0 0.0
    %243 = vmatpush1.xpose.msra.mxu0 0.0
    %244 = vmatprep.subr.mxu0 0.0
    %245 = vmatpush1.xpose.msra.mxu0 0.0
    %246 = vmatprep.mubr.f32.mxu0 0.0
    %247 = vmatmul.mubr.f32.gmra.mrb[0].mxu0 %v178
    %v248 = vpop.f32.mrb[0].mxu0
    %v249 = vadd.f32 %v70, %v248
    %v250 = vpop.f32.mrb[0].mxu0
    %251 = vdwg.mxu0
    %253 = vrot.lane.b32.xlu0 %v164, 96
    %v254 = vpop.permute.xlu0 %253
    %v256 = vsel %vm176, %v168, 0
    %v258 = vsel %vm176, %v254, 0
    %260 = vmatprep.subr.mxu0 0.0
    %261 = vmatpush1.xpose.msra.mxu0 %v258
    %262 = vmatprep.subr.mxu0 0.0
    %263 = vmatpush1.xpose.msra.mxu0 0.0
    %264 = vmatprep.subr.mxu0 0.0
    %265 = vmatpush1.xpose.msra.mxu0 0.0
    %266 = vmatprep.subr.mxu0 0.0
    %267 = vmatpush1.xpose.msra.mxu0 0.0
    %268 = vmatprep.subr.mxu0 0.0
    %269 = vmatpush1.xpose.msra.mxu0 0.0
    %270 = vmatprep.subr.mxu0 0.0
    %271 = vmatpush1.xpose.msra.mxu0 0.0
    %272 = vmatprep.subr.mxu0 0.0
    %273 = vmatpush1.xpose.msra.mxu0 0.0
    %274 = vmatprep.subr.mxu0 0.0
    %275 = vmatpush1.xpose.msra.mxu0 0.0
    %276 = vmatprep.subr.mxu0 0.0
    %277 = vmatpush1.xpose.msra.mxu0 0.0
    %278 = vmatprep.subr.mxu0 0.0
    %279 = vmatpush1.xpose.msra.mxu0 0.0
    %280 = vmatprep.subr.mxu0 0.0
    %281 = vmatpush1.xpose.msra.mxu0 0.0
    %282 = vmatprep.subr.mxu0 0.0
    %283 = vmatpush1.xpose.msra.mxu0 0.0
    %284 = vmatprep.subr.mxu0 0.0
    %285 = vmatpush1.xpose.msra.mxu0 0.0
    %286 = vmatprep.subr.mxu0 0.0
    %287 = vmatpush1.xpose.msra.mxu0 0.0
    %288 = vmatprep.subr.mxu0 0.0
    %289 = vmatpush1.xpose.msra.mxu0 0.0
    %290 = vmatprep.subr.mxu0 0.0
    %291 = vmatpush1.xpose.msra.mxu0 0.0
    %292 = vmatprep.subr.mxu0 0.0
    %293 = vmatpush1.xpose.msra.mxu0 0.0
    %294 = vmatprep.subr.mxu0 0.0
    %295 = vmatpush1.xpose.msra.mxu0 0.0
    %296 = vmatprep.subr.mxu0 0.0
    %297 = vmatpush1.xpose.msra.mxu0 0.0
    %298 = vmatprep.subr.mxu0 0.0
    %299 = vmatpush1.xpose.msra.mxu0 0.0
    %300 = vmatprep.subr.mxu0 0.0
    %301 = vmatpush1.xpose.msra.mxu0 0.0
    %302 = vmatprep.subr.mxu0 0.0
    %303 = vmatpush1.xpose.msra.mxu0 0.0
    %304 = vmatprep.subr.mxu0 0.0
    %305 = vmatpush1.xpose.msra.mxu0 0.0
    %306 = vmatprep.subr.mxu0 0.0
    %307 = vmatpush1.xpose.msra.mxu0 0.0
    %308 = vmatprep.subr.mxu0 0.0
    %309 = vmatpush1.xpose.msra.mxu0 0.0
    %310 = vmatprep.subr.mxu0 0.0
    %311 = vmatpush1.xpose.msra.mxu0 0.0
    %312 = vmatprep.subr.mxu0 0.0
    %313 = vmatpush1.xpose.msra.mxu0 0.0
    %314 = vmatprep.subr.mxu0 0.0
    %315 = vmatpush1.xpose.msra.mxu0 0.0
    %316 = vmatprep.subr.mxu0 0.0
    %317 = vmatpush1.xpose.msra.mxu0 0.0
    %318 = vmatprep.subr.mxu0 0.0
    %319 = vmatpush1.xpose.msra.mxu0 0.0
    %320 = vmatprep.subr.mxu0 0.0
    %321 = vmatpush1.xpose.msra.mxu0 0.0
    %322 = vmatprep.subr.mxu0 0.0
    %323 = vmatpush1.xpose.msra.mxu0 0.0
    %324 = vmatprep.mubr.f32.mxu0 0.0
    %325 = vmatmul.mubr.f32.gmra.mrb[0].mxu0 %v256
    %v326 = vpop.f32.mrb[0].mxu0
    %v327 = vadd.f32 %v71, %v326
    %v328 = vpop.f32.mrb[0].mxu0
    %329 = vdwg.mxu0
    %v330 = vsel %vm176, %v249, -inf
    %331 = vmax.xlane.f32.xlu0 %v330
    %v332 = vpop.xlane.xlu0 %331
    %v333 = vsel %vm176, %v327, -inf
    %334 = vmax.xlane.f32.xlu0 %v333
    %v335 = vpop.xlane.xlu0 %334
    %v336 = vsub.f32 %v249, %v332
    %v337 = vsub.f32 %v327, %v335
    %v338 = vmul.f32 %v336, 1.442695
    %v339 = vpow.pop %v338
    %v340 = vmul.f32 %v337, 1.442695
    %v341 = vpow.pop %v340
    %v342 = vsel %vm176, %v339, 0.0
    %343 = vadd.xlane.f32.xlu0 %v342
    %v344 = vpop.xlane.xlu0 %343
    %v345 = vsel %vm176, %v341, 0.0
    %346 = vadd.xlane.f32.xlu0 %v345
    %v347 = vpop.xlane.xlu0 %346
    %v348 = vrcp.pop %v344
    %v349 = vmul.f32 %v339, %v348
    %v350 = vrcp.pop %v347
    %v351 = vmul.f32 %v341, %v350
    %352 = vst.msk [vmem:[#allocation6] sm:$0xff] %vm176, %v349
    %353 = vst.msk [vmem:[#allocation6 + $0x8] sm:$0xff] %vm176, %v351
    %354 = vrot.lane.b32.xlu0 %v159, 64
    %v355 = vpop.permute.xlu0 %354
    %v358 = vsel %vm176, %v349, 0
    %360 = vmatprep.subr.mxu0 0.0
    %361 = vmatpush1.msra.mxu0 %v355
    %362 = vmatprep.subr.mxu0 0.0
    %363 = vmatpush1.msra.mxu0 0.0
    %364 = vmatprep.subr.mxu0 0.0
    %365 = vmatpush1.msra.mxu0 0.0
    %366 = vmatprep.subr.mxu0 0.0
    %367 = vmatpush1.msra.mxu0 0.0
    %368 = vmatprep.subr.mxu0 0.0
    %369 = vmatpush1.msra.mxu0 0.0
    %370 = vmatprep.subr.mxu0 0.0
    %371 = vmatpush1.msra.mxu0 0.0
    %372 = vmatprep.subr.mxu0 0.0
    %373 = vmatpush1.msra.mxu0 0.0
    %374 = vmatprep.subr.mxu0 0.0
    %375 = vmatpush1.msra.mxu0 0.0
    %376 = vmatprep.subr.mxu0 0.0
    %377 = vmatpush1.msra.mxu0 0.0
    %378 = vmatprep.subr.mxu0 0.0
    %379 = vmatpush1.msra.mxu0 0.0
    %380 = vmatprep.subr.mxu0 0.0
    %381 = vmatpush1.msra.mxu0 0.0
    %382 = vmatprep.subr.mxu0 0.0
    %383 = vmatpush1.msra.mxu0 0.0
    %384 = vmatprep.subr.mxu0 0.0
    %385 = vmatpush1.msra.mxu0 0.0
    %386 = vmatprep.subr.mxu0 0.0
    %387 = vmatpush1.msra.mxu0 0.0
    %388 = vmatprep.subr.mxu0 0.0
    %389 = vmatpush1.msra.mxu0 0.0
    %390 = vmatprep.subr.mxu0 0.0
    %391 = vmatpush1.msra.mxu0 0.0
    %392 = vmatprep.subr.mxu0 0.0
    %393 = vmatpush1.msra.mxu0 0.0
    %394 = vmatprep.subr.mxu0 0.0
    %395 = vmatpush1.msra.mxu0 0.0
    %396 = vmatprep.subr.mxu0 0.0
    %397 = vmatpush1.msra.mxu0 0.0
    %398 = vmatprep.subr.mxu0 0.0
    %399 = vmatpush1.msra.mxu0 0.0
    %400 = vmatprep.subr.mxu0 0.0
    %401 = vmatpush1.msra.mxu0 0.0
    %402 = vmatprep.subr.mxu0 0.0
    %403 = vmatpush1.msra.mxu0 0.0
    %404 = vmatprep.subr.mxu0 0.0
    %405 = vmatpush1.msra.mxu0 0.0
    %406 = vmatprep.subr.mxu0 0.0
    %407 = vmatpush1.msra.mxu0 0.0
    %408 = vmatprep.subr.mxu0 0.0
    %409 = vmatpush1.msra.mxu0 0.0
    %410 = vmatprep.subr.mxu0 0.0
    %411 = vmatpush1.msra.mxu0 0.0
    %412 = vmatprep.subr.mxu0 0.0
    %413 = vmatpush1.msra.mxu0 0.0
    %414 = vmatprep.subr.mxu0 0.0
    %415 = vmatpush1.msra.mxu0 0.0
    %416 = vmatprep.subr.mxu0 0.0
    %417 = vmatpush1.msra.mxu0 0.0
    %418 = vmatprep.subr.mxu0 0.0
    %419 = vmatpush1.msra.mxu0 0.0
    %420 = vmatprep.subr.mxu0 0.0
    %421 = vmatpush1.msra.mxu0 0.0
    %422 = vmatprep.subr.mxu0 0.0
    %423 = vmatpush1.msra.mxu0 0.0
    %424 = vmatprep.mubr.f32.mxu0 0.0
    %425 = vmatmul.mubr.f32.gmra.mrb[0].mxu0 %v358
    %v426 = vpop.f32.mrb[0].mxu0
    %v427 = vadd.f32 0.0, %v426
    %v428 = vpop.f32.mrb[0].mxu0
    %429 = vdwg.mxu0
    %430 = vrot.lane.b32.xlu0 %v164, 64
    %v431 = vpop.permute.xlu0 %430
    %v434 = vsel %vm176, %v351, 0
    %436 = vmatprep.subr.mxu0 0.0
    %437 = vmatpush1.msra.mxu0 %v431
    %438 = vmatprep.subr.mxu0 0.0
    %439 = vmatpush1.msra.mxu0 0.0
    %440 = vmatprep.subr.mxu0 0.0
    %441 = vmatpush1.msra.mxu0 0.0
    %442 = vmatprep.subr.mxu0 0.0
    %443 = vmatpush1.msra.mxu0 0.0
    %444 = vmatprep.subr.mxu0 0.0
    %445 = vmatpush1.msra.mxu0 0.0
    %446 = vmatprep.subr.mxu0 0.0
    %447 = vmatpush1.msra.mxu0 0.0
    %448 = vmatprep.subr.mxu0 0.0
    %449 = vmatpush1.msra.mxu0 0.0
    %450 = vmatprep.subr.mxu0 0.0
    %451 = vmatpush1.msra.mxu0 0.0
    %452 = vmatprep.subr.mxu0 0.0
    %453 = vmatpush1.msra.mxu0 0.0
    %454 = vmatprep.subr.mxu0 0.0
    %455 = vmatpush1.msra.mxu0 0.0
    %456 = vmatprep.subr.mxu0 0.0
    %457 = vmatpush1.msra.mxu0 0.0
    %458 = vmatprep.subr.mxu0 0.0
    %459 = vmatpush1.msra.mxu0 0.0
    %460 = vmatprep.subr.mxu0 0.0
    %461 = vmatpush1.msra.mxu0 0.0
    %462 = vmatprep.subr.mxu0 0.0
    %463 = vmatpush1.msra.mxu0 0.0
    %464 = vmatprep.subr.mxu0 0.0
    %465 = vmatpush1.msra.mxu0 0.0
    %466 = vmatprep.subr.mxu0 0.0
    %467 = vmatpush1.msra.mxu0 0.0
    %468 = vmatprep.subr.mxu0 0.0
    %469 = vmatpush1.msra.mxu0 0.0
    %470 = vmatprep.subr.mxu0 0.0
    %471 = vmatpush1.msra.mxu0 0.0
    %472 = vmatprep.subr.mxu0 0.0
    %473 = vmatpush1.msra.mxu0 0.0
    %474 = vmatprep.subr.mxu0 0.0
    %475 = vmatpush1.msra.mxu0 0.0
    %476 = vmatprep.subr.mxu0 0.0
    %477 = vmatpush1.msra.mxu0 0.0
    %478 = vmatprep.subr.mxu0 0.0
    %479 = vmatpush1.msra.mxu0 0.0
    %480 = vmatprep.subr.mxu0 0.0
    %481 = vmatpush1.msra.mxu0 0.0
    %482 = vmatprep.subr.mxu0 0.0
    %483 = vmatpush1.msra.mxu0 0.0
    %484 = vmatprep.subr.mxu0 0.0
    %485 = vmatpush1.msra.mxu0 0.0
    %486 = vmatprep.subr.mxu0 0.0
    %487 = vmatpush1.msra.mxu0 0.0
    %488 = vmatprep.subr.mxu0 0.0
    %489 = vmatpush1.msra.mxu0 0.0
    %490 = vmatprep.subr.mxu0 0.0
    %491 = vmatpush1.msra.mxu0 0.0
    %492 = vmatprep.subr.mxu0 0.0
    %493 = vmatpush1.msra.mxu0 0.0
    %494 = vmatprep.subr.mxu0 0.0
    %495 = vmatpush1.msra.mxu0 0.0
    %496 = vmatprep.subr.mxu0 0.0
    %497 = vmatpush1.msra.mxu0 0.0
    %498 = vmatprep.subr.mxu0 0.0
    %499 = vmatpush1.msra.mxu0 0.0
    %500 = vmatprep.mubr.f32.mxu0 0.0
    %501 = vmatmul.mubr.f32.gmra.mrb[0].mxu0 %v434
    %v502 = vpop.f32.mrb[0].mxu0
    %v503 = vadd.f32 0.0, %v502
    %v504 = vpop.f32.mrb[0].mxu0
    %505 = vdwg.mxu0
    %506 = vrot.lane.b32.xlu0 %v167, 120
    %v507 = vpop.permute.xlu0 %506
    %508 = vrot.lane.b32.xlu0 %v159, 88
    %v509 = vpop.permute.xlu0 %508
    %v510 = vsel %vm176, %v507, 0
    %v512 = vsel %vm176, %v509, 0
    %514 = vmatprep.subr.mxu0 0.0
    %515 = vmatpush1.xpose.msra.mxu0 %v512
    %516 = vmatprep.subr.mxu0 0.0
    %517 = vmatpush1.xpose.msra.mxu0 0.0
    %518 = vmatprep.subr.mxu0 0.0
    %519 = vmatpush1.xpose.msra.mxu0 0.0
    %520 = vmatprep.subr.mxu0 0.0
    %521 = vmatpush1.xpose.msra.mxu0 0.0
    %522 = vmatprep.subr.mxu0 0.0
    %523 = vmatpush1.xpose.msra.mxu0 0.0
    %524 = vmatprep.subr.mxu0 0.0
    %525 = vmatpush1.xpose.msra.mxu0 0.0
    %526 = vmatprep.subr.mxu0 0.0
    %527 = vmatpush1.xpose.msra.mxu0 0.0
    %528 = vmatprep.subr.mxu0 0.0
    %529 = vmatpush1.xpose.msra.mxu0 0.0
    %530 = vmatprep.subr.mxu0 0.0
    %531 = vmatpush1.xpose.msra.mxu0 0.0
    %532 = vmatprep.subr.mxu0 0.0
    %533 = vmatpush1.xpose.msra.mxu0 0.0
    %534 = vmatprep.subr.mxu0 0.0
    %535 = vmatpush1.xpose.msra.mxu0 0.0
    %536 = vmatprep.subr.mxu0 0.0
    %537 = vmatpush1.xpose.msra.mxu0 0.0
    %538 = vmatprep.subr.mxu0 0.0
    %539 = vmatpush1.xpose.msra.mxu0 0.0
    %540 = vmatprep.subr.mxu0 0.0
    %541 = vmatpush1.xpose.msra.mxu0 0.0
    %542 = vmatprep.subr.mxu0 0.0
    %543 = vmatpush1.xpose.msra.mxu0 0.0
    %544 = vmatprep.subr.mxu0 0.0
    %545 = vmatpush1.xpose.msra.mxu0 0.0
    %546 = vmatprep.subr.mxu0 0.0
    %547 = vmatpush1.xpose.msra.mxu0 0.0
    %548 = vmatprep.subr.mxu0 0.0
    %549 = vmatpush1.xpose.msra.mxu0 0.0
    %550 = vmatprep.subr.mxu0 0.0
    %551 = vmatpush1.xpose.msra.mxu0 0.0
    %552 = vmatprep.subr.mxu0 0.0
    %553 = vmatpush1.xpose.msra.mxu0 0.0
    %554 = vmatprep.subr.mxu0 0.0
    %555 = vmatpush1.xpose.msra.mxu0 0.0
    %556 = vmatprep.subr.mxu0 0.0
    %557 = vmatpush1.xpose.msra.mxu0 0.0
    %558 = vmatprep.subr.mxu0 0.0
    %559 = vmatpush1.xpose.msra.mxu0 0.0
    %560 = vmatprep.subr.mxu0 0.0
    %561 = vmatpush1.xpose.msra.mxu0 0.0
    %562 = vmatprep.subr.mxu0 0.0
    %563 = vmatpush1.xpose.msra.mxu0 0.0
    %564 = vmatprep.subr.mxu0 0.0
    %565 = vmatpush1.xpose.msra.mxu0 0.0
    %566 = vmatprep.subr.mxu0 0.0
    %567 = vmatpush1.xpose.msra.mxu0 0.0
    %568 = vmatprep.subr.mxu0 0.0
    %569 = vmatpush1.xpose.msra.mxu0 0.0
    %570 = vmatprep.subr.mxu0 0.0
    %571 = vmatpush1.xpose.msra.mxu0 0.0
    %572 = vmatprep.subr.mxu0 0.0
    %573 = vmatpush1.xpose.msra.mxu0 0.0
    %574 = vmatprep.subr.mxu0 0.0
    %575 = vmatpush1.xpose.msra.mxu0 0.0
    %576 = vmatprep.subr.mxu0 0.0
    %577 = vmatpush1.xpose.msra.mxu0 0.0
    %578 = vmatprep.mubr.f32.mxu0 0.0
    %579 = vmatmul.mubr.f32.gmra.mrb[0].mxu0 %v510
    %v580 = vpop.f32.mrb[0].mxu0
    %v581 = vadd.f32 %v70, %v580
    %v582 = vpop.f32.mrb[0].mxu0
    %583 = vdwg.mxu0
    %584 = vrot.lane.b32.xlu0 %v168, 120
    %v585 = vpop.permute.xlu0 %584
    %586 = vrot.lane.b32.xlu0 %v164, 88
    %v587 = vpop.permute.xlu0 %586
    %v588 = vsel %vm176, %v585, 0
    %v590 = vsel %vm176, %v587, 0
    %592 = vmatprep.subr.mxu0 0.0
    %593 = vmatpush1.xpose.msra.mxu0 %v590
    %594 = vmatprep.subr.mxu0 0.0
    %595 = vmatpush1.xpose.msra.mxu0 0.0
    %596 = vmatprep.subr.mxu0 0.0
    %597 = vmatpush1.xpose.msra.mxu0 0.0
    %598 = vmatprep.subr.mxu0 0.0
    %599 = vmatpush1.xpose.msra.mxu0 0.0
    %600 = vmatprep.subr.mxu0 0.0
    %601 = vmatpush1.xpose.msra.mxu0 0.0
    %602 = vmatprep.subr.mxu0 0.0
    %603 = vmatpush1.xpose.msra.mxu0 0.0
    %604 = vmatprep.subr.mxu0 0.0
    %605 = vmatpush1.xpose.msra.mxu0 0.0
    %606 = vmatprep.subr.mxu0 0.0
    %607 = vmatpush1.xpose.msra.mxu0 0.0
    %608 = vmatprep.subr.mxu0 0.0
    %609 = vmatpush1.xpose.msra.mxu0 0.0
    %610 = vmatprep.subr.mxu0 0.0
    %611 = vmatpush1.xpose.msra.mxu0 0.0
    %612 = vmatprep.subr.mxu0 0.0
    %613 = vmatpush1.xpose.msra.mxu0 0.0
    %614 = vmatprep.subr.mxu0 0.0
    %615 = vmatpush1.xpose.msra.mxu0 0.0
    %616 = vmatprep.subr.mxu0 0.0
    %617 = vmatpush1.xpose.msra.mxu0 0.0
    %618 = vmatprep.subr.mxu0 0.0
    %619 = vmatpush1.xpose.msra.mxu0 0.0
    %620 = vmatprep.subr.mxu0 0.0
    %621 = vmatpush1.xpose.msra.mxu0 0.0
    %622 = vmatprep.subr.mxu0 0.0
    %623 = vmatpush1.xpose.msra.mxu0 0.0
    %624 = vmatprep.subr.mxu0 0.0
    %625 = vmatpush1.xpose.msra.mxu0 0.0
    %626 = vmatprep.subr.mxu0 0.0
    %627 = vmatpush1.xpose.msra.mxu0 0.0
    %628 = vmatprep.subr.mxu0 0.0
    %629 = vmatpush1.xpose.msra.mxu0 0.0
    %630 = vmatprep.subr.mxu0 0.0
    %631 = vmatpush1.xpose.msra.mxu0 0.0
    %632 = vmatprep.subr.mxu0 0.0
    %633 = vmatpush1.xpose.msra.mxu0 0.0
    %634 = vmatprep.subr.mxu0 0.0
    %635 = vmatpush1.xpose.msra.mxu0 0.0
    %636 = vmatprep.subr.mxu0 0.0
    %637 = vmatpush1.xpose.msra.mxu0 0.0
    %638 = vmatprep.subr.mxu0 0.0
    %639 = vmatpush1.xpose.msra.mxu0 0.0
    %640 = vmatprep.subr.mxu0 0.0
    %641 = vmatpush1.xpose.msra.mxu0 0.0
    %642 = vmatprep.subr.mxu0 0.0
    %643 = vmatpush1.xpose.msra.mxu0 0.0
    %644 = vmatprep.subr.mxu0 0.0
    %645 = vmatpush1.xpose.msra.mxu0 0.0
    %646 = vmatprep.subr.mxu0 0.0
    %647 = vmatpush1.xpose.msra.mxu0 0.0
    %648 = vmatprep.subr.mxu0 0.0
    %649 = vmatpush1.xpose.msra.mxu0 0.0
    %650 = vmatprep.subr.mxu0 0.0
    %651 = vmatpush1.xpose.msra.mxu0 0.0
    %652 = vmatprep.subr.mxu0 0.0
    %653 = vmatpush1.xpose.msra.mxu0 0.0
    %654 = vmatprep.subr.mxu0 0.0
    %655 = vmatpush1.xpose.msra.mxu0 0.0
    %656 = vmatprep.mubr.f32.mxu0 0.0
    %657 = vmatmul.mubr.f32.gmra.mrb[0].mxu0 %v588
    %v658 = vpop.f32.mrb[0].mxu0
    %v659 = vadd.f32 %v71, %v658
    %v660 = vpop.f32.mrb[0].mxu0
    %661 = vdwg.mxu0
    %v662 = vsel %vm176, %v581, -inf
    %663 = vmax.xlane.f32.xlu0 %v662
    %v664 = vpop.xlane.xlu0 %663
    %v665 = vsel %vm176, %v659, -inf
    %666 = vmax.xlane.f32.xlu0 %v665
    %v667 = vpop.xlane.xlu0 %666
    %v668 = vsub.f32 %v581, %v664
    %v669 = vsub.f32 %v659, %v667
    %v670 = vmul.f32 %v668, 1.442695
    %v671 = vpow.pop %v670
    %v672 = vmul.f32 %v669, 1.442695
    %v673 = vpow.pop %v672
    %v674 = vsel %vm176, %v671, 0.0
    %675 = vadd.xlane.f32.xlu0 %v674
    %v676 = vpop.xlane.xlu0 %675
    %v677 = vsel %vm176, %v673, 0.0
    %678 = vadd.xlane.f32.xlu0 %v677
    %v679 = vpop.xlane.xlu0 %678
    %v680 = vrcp.pop %v676
    %v681 = vmul.f32 %v671, %v680
    %v682 = vrcp.pop %v679
    %v683 = vmul.f32 %v673, %v682
    %s684 = scalar_lea.vmem [#allocation6], 16
    %685 = vst.msk [vmem:[%s684] sm:$0xff] %vm176, %v681
    %686 = vst.msk [vmem:[%s684 + $0x8] sm:$0xff] %vm176, %v683
    %687 = vrot.lane.b32.xlu0 %v159, 56
    %v688 = vpop.permute.xlu0 %687
    %v691 = vsel %vm176, %v681, 0
    %693 = vmatprep.subr.mxu0 0.0
    %694 = vmatpush1.msra.mxu0 %v688
    %695 = vmatprep.subr.mxu0 0.0
    %696 = vmatpush1.msra.mxu0 0.0
    %697 = vmatprep.subr.mxu0 0.0
    %698 = vmatpush1.msra.mxu0 0.0
    %699 = vmatprep.subr.mxu0 0.0
    %700 = vmatpush1.msra.mxu0 0.0
    %701 = vmatprep.subr.mxu0 0.0
    %702 = vmatpush1.msra.mxu0 0.0
    %703 = vmatprep.subr.mxu0 0.0
    %704 = vmatpush1.msra.mxu0 0.0
    %705 = vmatprep.subr.mxu0 0.0
    %706 = vmatpush1.msra.mxu0 0.0
    %707 = vmatprep.subr.mxu0 0.0
    %708 = vmatpush1.msra.mxu0 0.0
    %709 = vmatprep.subr.mxu0 0.0
    %710 = vmatpush1.msra.mxu0 0.0
    %711 = vmatprep.subr.mxu0 0.0
    %712 = vmatpush1.msra.mxu0 0.0
    %713 = vmatprep.subr.mxu0 0.0
    %714 = vmatpush1.msra.mxu0 0.0
    %715 = vmatprep.subr.mxu0 0.0
    %716 = vmatpush1.msra.mxu0 0.0
    %717 = vmatprep.subr.mxu0 0.0
    %718 = vmatpush1.msra.mxu0 0.0
    %719 = vmatprep.subr.mxu0 0.0
    %720 = vmatpush1.msra.mxu0 0.0
    %721 = vmatprep.subr.mxu0 0.0
    %722 = vmatpush1.msra.mxu0 0.0
    %723 = vmatprep.subr.mxu0 0.0
    %724 = vmatpush1.msra.mxu0 0.0
    %725 = vmatprep.subr.mxu0 0.0
    %726 = vmatpush1.msra.mxu0 0.0
    %727 = vmatprep.subr.mxu0 0.0
    %728 = vmatpush1.msra.mxu0 0.0
    %729 = vmatprep.subr.mxu0 0.0
    %730 = vmatpush1.msra.mxu0 0.0
    %731 = vmatprep.subr.mxu0 0.0
    %732 = vmatpush1.msra.mxu0 0.0
    %733 = vmatprep.subr.mxu0 0.0
    %734 = vmatpush1.msra.mxu0 0.0
    %735 = vmatprep.subr.mxu0 0.0
    %736 = vmatpush1.msra.mxu0 0.0
    %737 = vmatprep.subr.mxu0 0.0
    %738 = vmatpush1.msra.mxu0 0.0
    %739 = vmatprep.subr.mxu0 0.0
    %740 = vmatpush1.msra.mxu0 0.0
    %741 = vmatprep.subr.mxu0 0.0
    %742 = vmatpush1.msra.mxu0 0.0
    %743 = vmatprep.subr.mxu0 0.0
    %744 = vmatpush1.msra.mxu0 0.0
    %745 = vmatprep.subr.mxu0 0.0
    %746 = vmatpush1.msra.mxu0 0.0
    %747 = vmatprep.subr.mxu0 0.0
    %748 = vmatpush1.msra.mxu0 0.0
    %749 = vmatprep.subr.mxu0 0.0
    %750 = vmatpush1.msra.mxu0 0.0
    %751 = vmatprep.subr.mxu0 0.0
    %752 = vmatpush1.msra.mxu0 0.0
    %753 = vmatprep.subr.mxu0 0.0
    %754 = vmatpush1.msra.mxu0 0.0
    %755 = vmatprep.subr.mxu0 0.0
    %756 = vmatpush1.msra.mxu0 0.0
    %757 = vmatprep.mubr.f32.mxu0 0.0
    %758 = vmatmul.mubr.f32.gmra.mrb[0].mxu0 %v691
    %v759 = vpop.f32.mrb[0].mxu0
    %v760 = vadd.f32 0.0, %v759
    %v761 = vpop.f32.mrb[0].mxu0
    %762 = vdwg.mxu0
    %763 = vrot.lane.b32.xlu0 %v164, 56
    %v764 = vpop.permute.xlu0 %763
    %v767 = vsel %vm176, %v683, 0
    %769 = vmatprep.subr.mxu0 0.0
    %770 = vmatpush1.msra.mxu0 %v764
    %771 = vmatprep.subr.mxu0 0.0
    %772 = vmatpush1.msra.mxu0 0.0
    %773 = vmatprep.subr.mxu0 0.0
    %774 = vmatpush1.msra.mxu0 0.0
    %775 = vmatprep.subr.mxu0 0.0
    %776 = vmatpush1.msra.mxu0 0.0
    %777 = vmatprep.subr.mxu0 0.0
    %778 = vmatpush1.msra.mxu0 0.0
    %779 = vmatprep.subr.mxu0 0.0
    %780 = vmatpush1.msra.mxu0 0.0
    %781 = vmatprep.subr.mxu0 0.0
    %782 = vmatpush1.msra.mxu0 0.0
    %783 = vmatprep.subr.mxu0 0.0
    %784 = vmatpush1.msra.mxu0 0.0
    %785 = vmatprep.subr.mxu0 0.0
    %786 = vmatpush1.msra.mxu0 0.0
    %787 = vmatprep.subr.mxu0 0.0
    %788 = vmatpush1.msra.mxu0 0.0
    %789 = vmatprep.subr.mxu0 0.0
    %790 = vmatpush1.msra.mxu0 0.0
    %791 = vmatprep.subr.mxu0 0.0
    %792 = vmatpush1.msra.mxu0 0.0
    %793 = vmatprep.subr.mxu0 0.0
    %794 = vmatpush1.msra.mxu0 0.0
    %795 = vmatprep.subr.mxu0 0.0
    %796 = vmatpush1.msra.mxu0 0.0
    %797 = vmatprep.subr.mxu0 0.0
    %798 = vmatpush1.msra.mxu0 0.0
    %799 = vmatprep.subr.mxu0 0.0
    %800 = vmatpush1.msra.mxu0 0.0
    %801 = vmatprep.subr.mxu0 0.0
    %802 = vmatpush1.msra.mxu0 0.0
    %803 = vmatprep.subr.mxu0 0.0
    %804 = vmatpush1.msra.mxu0 0.0
    %805 = vmatprep.subr.mxu0 0.0
    %806 = vmatpush1.msra.mxu0 0.0
    %807 = vmatprep.subr.mxu0 0.0
    %808 = vmatpush1.msra.mxu0 0.0
    %809 = vmatprep.subr.mxu0 0.0
    %810 = vmatpush1.msra.mxu0 0.0
    %811 = vmatprep.subr.mxu0 0.0
    %812 = vmatpush1.msra.mxu0 0.0
    %813 = vmatprep.subr.mxu0 0.0
    %814 = vmatpush1.msra.mxu0 0.0
    %815 = vmatprep.subr.mxu0 0.0
    %816 = vmatpush1.msra.mxu0 0.0
    %817 = vmatprep.subr.mxu0 0.0
    %818 = vmatpush1.msra.mxu0 0.0
    %819 = vmatprep.subr.mxu0 0.0
    %820 = vmatpush1.msra.mxu0 0.0
    %821 = vmatprep.subr.mxu0 0.0
    %822 = vmatpush1.msra.mxu0 0.0
    %823 = vmatprep.subr.mxu0 0.0
    %824 = vmatpush1.msra.mxu0 0.0
    %825 = vmatprep.subr.mxu0 0.0
    %826 = vmatpush1.msra.mxu0 0.0
    %827 = vmatprep.subr.mxu0 0.0
    %828 = vmatpush1.msra.mxu0 0.0
    %829 = vmatprep.subr.mxu0 0.0
    %830 = vmatpush1.msra.mxu0 0.0
    %831 = vmatprep.subr.mxu0 0.0
    %832 = vmatpush1.msra.mxu0 0.0
    %833 = vmatprep.mubr.f32.mxu0 0.0
    %834 = vmatmul.mubr.f32.gmra.mrb[0].mxu0 %v767
    %v835 = vpop.f32.mrb[0].mxu0
    %v836 = vadd.f32 0.0, %v835
    %v837 = vpop.f32.mrb[0].mxu0
    %838 = vdwg.mxu0
    %v840 = vsel %vm176, %v760, 0
    %v843 = vsel %vm176, %v836, 0
    %845 = vmatprep.subr.mxu0 0.0
    %846 = vmatpush1.msra.mxu0 %v170
    %847 = vmatprep.subr.mxu0 0.0
    %848 = vmatpush1.msra.mxu0 0.0
    %849 = vmatprep.subr.mxu0 0.0
    %850 = vmatpush1.msra.mxu0 0.0
    %851 = vmatprep.subr.mxu0 0.0
    %852 = vmatpush1.msra.mxu0 0.0
    %853 = vmatprep.subr.mxu0 0.0
    %854 = vmatpush1.msra.mxu0 0.0
    %855 = vmatprep.subr.mxu0 0.0
    %856 = vmatpush1.msra.mxu0 0.0
    %857 = vmatprep.subr.mxu0 0.0
    %858 = vmatpush1.msra.mxu0 0.0
    %859 = vmatprep.subr.mxu0 0.0
    %860 = vmatpush1.msra.mxu0 0.0
    %861 = vmatprep.subr.mxu0 0.0
    %862 = vmatpush1.msra.mxu0 0.0
    %863 = vmatprep.subr.mxu0 0.0
    %864 = vmatpush1.msra.mxu0 0.0
    %865 = vmatprep.subr.mxu0 0.0
    %866 = vmatpush1.msra.mxu0 0.0
    %867 = vmatprep.subr.mxu0 0.0
    %868 = vmatpush1.msra.mxu0 0.0
    %869 = vmatprep.subr.mxu0 0.0
    %870 = vmatpush1.msra.mxu0 0.0
    %871 = vmatprep.subr.mxu0 0.0
    %872 = vmatpush1.msra.mxu0 0.0
    %873 = vmatprep.subr.mxu0 0.0
    %874 = vmatpush1.msra.mxu0 0.0
    %875 = vmatprep.subr.mxu0 0.0
    %876 = vmatpush1.msra.mxu0 0.0
    %877 = vmatprep.subr.mxu0 0.0
    %878 = vmatpush1.msra.mxu0 0.0
    %879 = vmatprep.subr.mxu0 0.0
    %880 = vmatpush1.msra.mxu0 0.0
    %881 = vmatprep.subr.mxu0 0.0
    %882 = vmatpush1.msra.mxu0 0.0
    %883 = vmatprep.subr.mxu0 0.0
    %884 = vmatpush1.msra.mxu0 0.0
    %885 = vmatprep.subr.mxu0 0.0
    %886 = vmatpush1.msra.mxu0 0.0
    %887 = vmatprep.subr.mxu0 0.0
    %888 = vmatpush1.msra.mxu0 0.0
    %889 = vmatprep.subr.mxu0 0.0
    %890 = vmatpush1.msra.mxu0 0.0
    %891 = vmatprep.subr.mxu0 0.0
    %892 = vmatpush1.msra.mxu0 0.0
    %893 = vmatprep.subr.mxu0 0.0
    %894 = vmatpush1.msra.mxu0 0.0
    %895 = vmatprep.subr.mxu0 0.0
    %896 = vmatpush1.msra.mxu0 0.0
    %897 = vmatprep.subr.mxu0 0.0
    %898 = vmatpush1.msra.mxu0 0.0
    %899 = vmatprep.subr.mxu0 0.0
    %900 = vmatpush1.msra.mxu0 0.0
    %901 = vmatprep.subr.mxu0 0.0
    %902 = vmatpush1.msra.mxu0 0.0
    %903 = vmatprep.subr.mxu0 0.0
    %904 = vmatpush1.msra.mxu0 0.0
    %905 = vmatprep.subr.mxu0 0.0
    %906 = vmatpush1.msra.mxu0 0.0
    %907 = vmatprep.subr.mxu0 0.0
    %908 = vmatpush1.msra.mxu0 0.0
    %909 = vmatprep.mubr.f32.mxu0 0.0
    %910 = vmatmul.mubr.f32.gmra.mrb[0].mxu0 %v840
    %v911 = vpop.f32.mrb[0].mxu0
    %v912 = vadd.f32 0.0, %v911
    %v913 = vpop.f32.mrb[0].mxu0
    %914 = vmatprep.mubr.f32.mxu0 0.0
    %915 = vmatmul.mubr.f32.gmra.mrb[0].mxu0 %v843
    %v916 = vpop.f32.mrb[0].mxu0
    %v917 = vadd.f32 0.0, %v916
    %v918 = vpop.f32.mrb[0].mxu0
    %919 = vdwg.mxu0
    %v921 = vsel %vm176, %v427, 0
    %v924 = vsel %vm176, %v503, 0
    %926 = vmatprep.subr.mxu0 0.0
    %927 = vmatpush1.msra.mxu0 %v169
    %928 = vmatprep.subr.mxu0 0.0
    %929 = vmatpush1.msra.mxu0 0.0
    %930 = vmatprep.subr.mxu0 0.0
    %931 = vmatpush1.msra.mxu0 0.0
    %932 = vmatprep.subr.mxu0 0.0
    %933 = vmatpush1.msra.mxu0 0.0
    %934 = vmatprep.subr.mxu0 0.0
    %935 = vmatpush1.msra.mxu0 0.0
    %936 = vmatprep.subr.mxu0 0.0
    %937 = vmatpush1.msra.mxu0 0.0
    %938 = vmatprep.subr.mxu0 0.0
    %939 = vmatpush1.msra.mxu0 0.0
    %940 = vmatprep.subr.mxu0 0.0
    %941 = vmatpush1.msra.mxu0 0.0
    %942 = vmatprep.subr.mxu0 0.0
    %943 = vmatpush1.msra.mxu0 0.0
    %944 = vmatprep.subr.mxu0 0.0
    %945 = vmatpush1.msra.mxu0 0.0
    %946 = vmatprep.subr.mxu0 0.0
    %947 = vmatpush1.msra.mxu0 0.0
    %948 = vmatprep.subr.mxu0 0.0
    %949 = vmatpush1.msra.mxu0 0.0
    %950 = vmatprep.subr.mxu0 0.0
    %951 = vmatpush1.msra.mxu0 0.0
    %952 = vmatprep.subr.mxu0 0.0
    %953 = vmatpush1.msra.mxu0 0.0
    %954 = vmatprep.subr.mxu0 0.0
    %955 = vmatpush1.msra.mxu0 0.0
    %956 = vmatprep.subr.mxu0 0.0
    %957 = vmatpush1.msra.mxu0 0.0
    %958 = vmatprep.subr.mxu0 0.0
    %959 = vmatpush1.msra.mxu0 0.0
    %960 = vmatprep.subr.mxu0 0.0
    %961 = vmatpush1.msra.mxu0 0.0
    %962 = vmatprep.subr.mxu0 0.0
    %963 = vmatpush1.msra.mxu0 0.0
    %964 = vmatprep.subr.mxu0 0.0
    %965 = vmatpush1.msra.mxu0 0.0
    %966 = vmatprep.subr.mxu0 0.0
    %967 = vmatpush1.msra.mxu0 0.0
    %968 = vmatprep.subr.mxu0 0.0
    %969 = vmatpush1.msra.mxu0 0.0
    %970 = vmatprep.subr.mxu0 0.0
    %971 = vmatpush1.msra.mxu0 0.0
    %972 = vmatprep.subr.mxu0 0.0
    %973 = vmatpush1.msra.mxu0 0.0
    %974 = vmatprep.subr.mxu0 0.0
    %975 = vmatpush1.msra.mxu0 0.0
    %976 = vmatprep.subr.mxu0 0.0
    %977 = vmatpush1.msra.mxu0 0.0
    %978 = vmatprep.subr.mxu0 0.0
    %979 = vmatpush1.msra.mxu0 0.0
    %980 = vmatprep.subr.mxu0 0.0
    %981 = vmatpush1.msra.mxu0 0.0
    %982 = vmatprep.subr.mxu0 0.0
    %983 = vmatpush1.msra.mxu0 0.0
    %984 = vmatprep.subr.mxu0 0.0
    %985 = vmatpush1.msra.mxu0 0.0
    %986 = vmatprep.subr.mxu0 0.0
    %987 = vmatpush1.msra.mxu0 0.0
    %988 = vmatprep.subr.mxu0 0.0
    %989 = vmatpush1.msra.mxu0 0.0
    %990 = vmatprep.mubr.f32.mxu0 0.0
    %991 = vmatmul.mubr.f32.gmra.mrb[0].mxu0 %v921
    %v992 = vpop.f32.mrb[0].mxu0
    %v993 = vadd.f32 %v912, %v992
    %v994 = vpop.f32.mrb[0].mxu0
    %995 = vmatprep.mubr.f32.mxu0 0.0
    %996 = vmatmul.mubr.f32.gmra.mrb[0].mxu0 %v924
    %v997 = vpop.f32.mrb[0].mxu0
    %v998 = vadd.f32 %v917, %v997
    %v999 = vpop.f32.mrb[0].mxu0
    %1000 = vdwg.mxu0
    %1001 = vrot.lane.b32.xlu0 %v167, 112
    %v1002 = vpop.permute.xlu0 %1001
    %1003 = vrot.lane.b32.xlu0 %v159, 80
    %v1004 = vpop.permute.xlu0 %1003
    %v1005 = vsel %vm176, %v1002, 0
    %v1007 = vsel %vm176, %v1004, 0
    %1009 = vmatprep.subr.mxu0 0.0
    %1010 = vmatpush1.xpose.msra.mxu0 %v1007
    %1011 = vmatprep.subr.mxu0 0.0
    %1012 = vmatpush1.xpose.msra.mxu0 0.0
    %1013 = vmatprep.subr.mxu0 0.0
    %1014 = vmatpush1.xpose.msra.mxu0 0.0
    %1015 = vmatprep.subr.mxu0 0.0
    %1016 = vmatpush1.xpose.msra.mxu0 0.0
    %1017 = vmatprep.subr.mxu0 0.0
    %1018 = vmatpush1.xpose.msra.mxu0 0.0
    %1019 = vmatprep.subr.mxu0 0.0
    %1020 = vmatpush1.xpose.msra.mxu0 0.0
    %1021 = vmatprep.subr.mxu0 0.0
    %1022 = vmatpush1.xpose.msra.mxu0 0.0
    %1023 = vmatprep.subr.mxu0 0.0
    %1024 = vmatpush1.xpose.msra.mxu0 0.0
    %1025 = vmatprep.subr.mxu0 0.0
    %1026 = vmatpush1.xpose.msra.mxu0 0.0
    %1027 = vmatprep.subr.mxu0 0.0
    %1028 = vmatpush1.xpose.msra.mxu0 0.0
    %1029 = vmatprep.subr.mxu0 0.0
    %1030 = vmatpush1.xpose.msra.mxu0 0.0
    %1031 = vmatprep.subr.mxu0 0.0
    %1032 = vmatpush1.xpose.msra.mxu0 0.0
    %1033 = vmatprep.subr.mxu0 0.0
    %1034 = vmatpush1.xpose.msra.mxu0 0.0
    %1035 = vmatprep.subr.mxu0 0.0
    %1036 = vmatpush1.xpose.msra.mxu0 0.0
    %1037 = vmatprep.subr.mxu0 0.0
    %1038 = vmatpush1.xpose.msra.mxu0 0.0
    %1039 = vmatprep.subr.mxu0 0.0
    %1040 = vmatpush1.xpose.msra.mxu0 0.0
    %1041 = vmatprep.subr.mxu0 0.0
    %1042 = vmatpush1.xpose.msra.mxu0 0.0
    %1043 = vmatprep.subr.mxu0 0.0
    %1044 = vmatpush1.xpose.msra.mxu0 0.0
    %1045 = vmatprep.subr.mxu0 0.0
    %1046 = vmatpush1.xpose.msra.mxu0 0.0
    %1047 = vmatprep.subr.mxu0 0.0
    %1048 = vmatpush1.xpose.msra.mxu0 0.0
    %1049 = vmatprep.subr.mxu0 0.0
    %1050 = vmatpush1.xpose.msra.mxu0 0.0
    %1051 = vmatprep.subr.mxu0 0.0
    %1052 = vmatpush1.xpose.msra.mxu0 0.0
    %1053 = vmatprep.subr.mxu0 0.0
    %1054 = vmatpush1.xpose.msra.mxu0 0.0
    %1055 = vmatprep.subr.mxu0 0.0
    %1056 = vmatpush1.xpose.msra.mxu0 0.0
    %1057 = vmatprep.subr.mxu0 0.0
    %1058 = vmatpush1.xpose.msra.mxu0 0.0
    %1059 = vmatprep.subr.mxu0 0.0
    %1060 = vmatpush1.xpose.msra.mxu0 0.0
    %1061 = vmatprep.subr.mxu0 0.0
    %1062 = vmatpush1.xpose.msra.mxu0 0.0
    %1063 = vmatprep.subr.mxu0 0.0
    %1064 = vmatpush1.xpose.msra.mxu0 0.0
    %1065 = vmatprep.subr.mxu0 0.0
    %1066 = vmatpush1.xpose.msra.mxu0 0.0
    %1067 = vmatprep.subr.mxu0 0.0
    %1068 = vmatpush1.xpose.msra.mxu0 0.0
    %1069 = vmatprep.subr.mxu0 0.0
    %1070 = vmatpush1.xpose.msra.mxu0 0.0
    %1071 = vmatprep.subr.mxu0 0.0
    %1072 = vmatpush1.xpose.msra.mxu0 0.0
    %1073 = vmatprep.mubr.f32.mxu0 0.0
    %1074 = vmatmul.mubr.f32.gmra.mrb[0].mxu0 %v1005
    %v1075 = vpop.f32.mrb[0].mxu0
    %v1076 = vadd.f32 %v70, %v1075
    %v1077 = vpop.f32.mrb[0].mxu0
    %1078 = vdwg.mxu0
    %1079 = vrot.lane.b32.xlu0 %v168, 112
    %v1080 = vpop.permute.xlu0 %1079
    %1081 = vrot.lane.b32.xlu0 %v164, 80
    %v1082 = vpop.permute.xlu0 %1081
    %v1083 = vsel %vm176, %v1080, 0
    %v1085 = vsel %vm176, %v1082, 0
    %1087 = vmatprep.subr.mxu0 0.0
    %1088 = vmatpush1.xpose.msra.mxu0 %v1085
    %1089 = vmatprep.subr.mxu0 0.0
    %1090 = vmatpush1.xpose.msra.mxu0 0.0
    %1091 = vmatprep.subr.mxu0 0.0
    %1092 = vmatpush1.xpose.msra.mxu0 0.0
    %1093 = vmatprep.subr.mxu0 0.0
    %1094 = vmatpush1.xpose.msra.mxu0 0.0
    %1095 = vmatprep.subr.mxu0 0.0
    %1096 = vmatpush1.xpose.msra.mxu0 0.0
    %1097 = vmatprep.subr.mxu0 0.0
    %1098 = vmatpush1.xpose.msra.mxu0 0.0
    %1099 = vmatprep.subr.mxu0 0.0
    %1100 = vmatpush1.xpose.msra.mxu0 0.0
    %1101 = vmatprep.subr.mxu0 0.0
    %1102 = vmatpush1.xpose.msra.mxu0 0.0
    %1103 = vmatprep.subr.mxu0 0.0
    %1104 = vmatpush1.xpose.msra.mxu0 0.0
    %1105 = vmatprep.subr.mxu0 0.0
    %1106 = vmatpush1.xpose.msra.mxu0 0.0
    %1107 = vmatprep.subr.mxu0 0.0
    %1108 = vmatpush1.xpose.msra.mxu0 0.0
    %1109 = vmatprep.subr.mxu0 0.0
    %1110 = vmatpush1.xpose.msra.mxu0 0.0
    %1111 = vmatprep.subr.mxu0 0.0
    %1112 = vmatpush1.xpose.msra.mxu0 0.0
    %1113 = vmatprep.subr.mxu0 0.0
    %1114 = vmatpush1.xpose.msra.mxu0 0.0
    %1115 = vmatprep.subr.mxu0 0.0
    %1116 = vmatpush1.xpose.msra.mxu0 0.0
    %1117 = vmatprep.subr.mxu0 0.0
    %1118 = vmatpush1.xpose.msra.mxu0 0.0
    %1119 = vmatprep.subr.mxu0 0.0
    %1120 = vmatpush1.xpose.msra.mxu0 0.0
    %1121 = vmatprep.subr.mxu0 0.0
    %1122 = vmatpush1.xpose.msra.mxu0 0.0
    %1123 = vmatprep.subr.mxu0 0.0
    %1124 = vmatpush1.xpose.msra.mxu0 0.0
    %1125 = vmatprep.subr.mxu0 0.0
    %1126 = vmatpush1.xpose.msra.mxu0 0.0
    %1127 = vmatprep.subr.mxu0 0.0
    %1128 = vmatpush1.xpose.msra.mxu0 0.0
    %1129 = vmatprep.subr.mxu0 0.0
    %1130 = vmatpush1.xpose.msra.mxu0 0.0
    %1131 = vmatprep.subr.mxu0 0.0
    %1132 = vmatpush1.xpose.msra.mxu0 0.0
    %1133 = vmatprep.subr.mxu0 0.0
    %1134 = vmatpush1.xpose.msra.mxu0 0.0
    %1135 = vmatprep.subr.mxu0 0.0
    %1136 = vmatpush1.xpose.msra.mxu0 0.0
    %1137 = vmatprep.subr.mxu0 0.0
    %1138 = vmatpush1.xpose.msra.mxu0 0.0
    %1139 = vmatprep.subr.mxu0 0.0
    %1140 = vmatpush1.xpose.msra.mxu0 0.0
    %1141 = vmatprep.subr.mxu0 0.0
    %1142 = vmatpush1.xpose.msra.mxu0 0.0
    %1143 = vmatprep.subr.mxu0 0.0
    %1144 = vmatpush1.xpose.msra.mxu0 0.0
    %1145 = vmatprep.subr.mxu0 0.0
    %1146 = vmatpush1.xpose.msra.mxu0 0.0
    %1147 = vmatprep.subr.mxu0 0.0
    %1148 = vmatpush1.xpose.msra.mxu0 0.0
    %1149 = vmatprep.subr.mxu0 0.0
    %1150 = vmatpush1.xpose.msra.mxu0 0.0
    %1151 = vmatprep.mubr.f32.mxu0 0.0
    %1152 = vmatmul.mubr.f32.gmra.mrb[0].mxu0 %v1083
    %v1153 = vpop.f32.mrb[0].mxu0
    %v1154 = vadd.f32 %v71, %v1153
    %v1155 = vpop.f32.mrb[0].mxu0
    %1156 = vdwg.mxu0
    %v1157 = vsel %vm176, %v1076, -inf
    %1158 = vmax.xlane.f32.xlu0 %v1157
    %v1159 = vpop.xlane.xlu0 %1158
    %v1160 = vsel %vm176, %v1154, -inf
    %1161 = vmax.xlane.f32.xlu0 %v1160
    %v1162 = vpop.xlane.xlu0 %1161
    %v1163 = vsub.f32 %v1076, %v1159
    %v1164 = vsub.f32 %v1154, %v1162
    %v1165 = vmul.f32 %v1163, 1.442695
    %v1166 = vpow.pop %v1165
    %v1167 = vmul.f32 %v1164, 1.442695
    %v1168 = vpow.pop %v1167
    %v1169 = vsel %vm176, %v1166, 0.0
    %1170 = vadd.xlane.f32.xlu0 %v1169
    %v1171 = vpop.xlane.xlu0 %1170
    %v1172 = vsel %vm176, %v1168, 0.0
    %1173 = vadd.xlane.f32.xlu0 %v1172
    %v1174 = vpop.xlane.xlu0 %1173
    %v1175 = vrcp.pop %v1171
    %v1176 = vmul.f32 %v1166, %v1175
    %v1177 = vrcp.pop %v1174
    %v1178 = vmul.f32 %v1168, %v1177
    %s1179 = scalar_lea.vmem [#allocation6], 32
    %1180 = vst.msk [vmem:[%s1179] sm:$0xff] %vm176, %v1176
    %1181 = vst.msk [vmem:[%s1179 + $0x8] sm:$0xff] %vm176, %v1178
    %1182 = vrot.lane.b32.xlu0 %v159, 48
    %v1183 = vpop.permute.xlu0 %1182
    %v1186 = vsel %vm176, %v1176, 0
    %1188 = vmatprep.subr.mxu0 0.0
    %1189 = vmatpush1.msra.mxu0 %v1183
    %1190 = vmatprep.subr.mxu0 0.0
    %1191 = vmatpush1.msra.mxu0 0.0
    %1192 = vmatprep.subr.mxu0 0.0
    %1193 = vmatpush1.msra.mxu0 0.0
    %1194 = vmatprep.subr.mxu0 0.0
    %1195 = vmatpush1.msra.mxu0 0.0
    %1196 = vmatprep.subr.mxu0 0.0
    %1197 = vmatpush1.msra.mxu0 0.0
    %1198 = vmatprep.subr.mxu0 0.0
    %1199 = vmatpush1.msra.mxu0 0.0
    %1200 = vmatprep.subr.mxu0 0.0
    %1201 = vmatpush1.msra.mxu0 0.0
    %1202 = vmatprep.subr.mxu0 0.0
    %1203 = vmatpush1.msra.mxu0 0.0
    %1204 = vmatprep.subr.mxu0 0.0
    %1205 = vmatpush1.msra.mxu0 0.0
    %1206 = vmatprep.subr.mxu0 0.0
    %1207 = vmatpush1.msra.mxu0 0.0
    %1208 = vmatprep.subr.mxu0 0.0
    %1209 = vmatpush1.msra.mxu0 0.0
    %1210 = vmatprep.subr.mxu0 0.0
    %1211 = vmatpush1.msra.mxu0 0.0
    %1212 = vmatprep.subr.mxu0 0.0
    %1213 = vmatpush1.msra.mxu0 0.0
    %1214 = vmatprep.subr.mxu0 0.0
    %1215 = vmatpush1.msra.mxu0 0.0
    %1216 = vmatprep.subr.mxu0 0.0
    %1217 = vmatpush1.msra.mxu0 0.0
    %1218 = vmatprep.subr.mxu0 0.0
    %1219 = vmatpush1.msra.mxu0 0.0
    %1220 = vmatprep.subr.mxu0 0.0
    %1221 = vmatpush1.msra.mxu0 0.0
    %1222 = vmatprep.subr.mxu0 0.0
    %1223 = vmatpush1.msra.mxu0 0.0
    %1224 = vmatprep.subr.mxu0 0.0
    %1225 = vmatpush1.msra.mxu0 0.0
    %1226 = vmatprep.subr.mxu0 0.0
    %1227 = vmatpush1.msra.mxu0 0.0
    %1228 = vmatprep.subr.mxu0 0.0
    %1229 = vmatpush1.msra.mxu0 0.0
    %1230 = vmatprep.subr.mxu0 0.0
    %1231 = vmatpush1.msra.mxu0 0.0
    %1232 = vmatprep.subr.mxu0 0.0
    %1233 = vmatpush1.msra.mxu0 0.0
    %1234 = vmatprep.subr.mxu0 0.0
    %1235 = vmatpush1.msra.mxu0 0.0
    %1236 = vmatprep.subr.mxu0 0.0
    %1237 = vmatpush1.msra.mxu0 0.0
    %1238 = vmatprep.subr.mxu0 0.0
    %1239 = vmatpush1.msra.mxu0 0.0
    %1240 = vmatprep.subr.mxu0 0.0
    %1241 = vmatpush1.msra.mxu0 0.0
    %1242 = vmatprep.subr.mxu0 0.0
    %1243 = vmatpush1.msra.mxu0 0.0
    %1244 = vmatprep.subr.mxu0 0.0
    %1245 = vmatpush1.msra.mxu0 0.0
    %1246 = vmatprep.subr.mxu0 0.0
    %1247 = vmatpush1.msra.mxu0 0.0
    %1248 = vmatprep.subr.mxu0 0.0
    %1249 = vmatpush1.msra.mxu0 0.0
    %1250 = vmatprep.subr.mxu0 0.0
    %1251 = vmatpush1.msra.mxu0 0.0
    %1252 = vmatprep.mubr.f32.mxu0 0.0
    %1253 = vmatmul.mubr.f32.gmra.mrb[0].mxu0 %v1186
    %v1254 = vpop.f32.mrb[0].mxu0
    %v1255 = vadd.f32 0.0, %v1254
    %v1256 = vpop.f32.mrb[0].mxu0
    %1257 = vdwg.mxu0
    %1258 = vrot.lane.b32.xlu0 %v164, 48
    %v1259 = vpop.permute.xlu0 %1258
    %v1262 = vsel %vm176, %v1178, 0
    %1264 = vmatprep.subr.mxu0 0.0
    %1265 = vmatpush1.msra.mxu0 %v1259
    %1266 = vmatprep.subr.mxu0 0.0
    %1267 = vmatpush1.msra.mxu0 0.0
    %1268 = vmatprep.subr.mxu0 0.0
    %1269 = vmatpush1.msra.mxu0 0.0
    %1270 = vmatprep.subr.mxu0 0.0
    %1271 = vmatpush1.msra.mxu0 0.0
    %1272 = vmatprep.subr.mxu0 0.0
    %1273 = vmatpush1.msra.mxu0 0.0
    %1274 = vmatprep.subr.mxu0 0.0
    %1275 = vmatpush1.msra.mxu0 0.0
    %1276 = vmatprep.subr.mxu0 0.0
    %1277 = vmatpush1.msra.mxu0 0.0
    %1278 = vmatprep.subr.mxu0 0.0
    %1279 = vmatpush1.msra.mxu0 0.0
    %1280 = vmatprep.subr.mxu0 0.0
    %1281 = vmatpush1.msra.mxu0 0.0
    %1282 = vmatprep.subr.mxu0 0.0
    %1283 = vmatpush1.msra.mxu0 0.0
    %1284 = vmatprep.subr.mxu0 0.0
    %1285 = vmatpush1.msra.mxu0 0.0
    %1286 = vmatprep.subr.mxu0 0.0
    %1287 = vmatpush1.msra.mxu0 0.0
    %1288 = vmatprep.subr.mxu0 0.0
    %1289 = vmatpush1.msra.mxu0 0.0
    %1290 = vmatprep.subr.mxu0 0.0
    %1291 = vmatpush1.msra.mxu0 0.0
    %1292 = vmatprep.subr.mxu0 0.0
    %1293 = vmatpush1.msra.mxu0 0.0
    %1294 = vmatprep.subr.mxu0 0.0
    %1295 = vmatpush1.msra.mxu0 0.0
    %1296 = vmatprep.subr.mxu0 0.0
    %1297 = vmatpush1.msra.mxu0 0.0
    %1298 = vmatprep.subr.mxu0 0.0
    %1299 = vmatpush1.msra.mxu0 0.0
    %1300 = vmatprep.subr.mxu0 0.0
    %1301 = vmatpush1.msra.mxu0 0.0
    %1302 = vmatprep.subr.mxu0 0.0
    %1303 = vmatpush1.msra.mxu0 0.0
    %1304 = vmatprep.subr.mxu0 0.0
    %1305 = vmatpush1.msra.mxu0 0.0
    %1306 = vmatprep.subr.mxu0 0.0
    %1307 = vmatpush1.msra.mxu0 0.0
    %1308 = vmatprep.subr.mxu0 0.0
    %1309 = vmatpush1.msra.mxu0 0.0
    %1310 = vmatprep.subr.mxu0 0.0
    %1311 = vmatpush1.msra.mxu0 0.0
    %1312 = vmatprep.subr.mxu0 0.0
    %1313 = vmatpush1.msra.mxu0 0.0
    %1314 = vmatprep.subr.mxu0 0.0
    %1315 = vmatpush1.msra.mxu0 0.0
    %1316 = vmatprep.subr.mxu0 0.0
    %1317 = vmatpush1.msra.mxu0 0.0
    %1318 = vmatprep.subr.mxu0 0.0
    %1319 = vmatpush1.msra.mxu0 0.0
    %1320 = vmatprep.subr.mxu0 0.0
    %1321 = vmatpush1.msra.mxu0 0.0
    %1322 = vmatprep.subr.mxu0 0.0
    %1323 = vmatpush1.msra.mxu0 0.0
    %1324 = vmatprep.subr.mxu0 0.0
    %1325 = vmatpush1.msra.mxu0 0.0
    %1326 = vmatprep.subr.mxu0 0.0
    %1327 = vmatpush1.msra.mxu0 0.0
    %1328 = vmatprep.mubr.f32.mxu0 0.0
    %1329 = vmatmul.mubr.f32.gmra.mrb[0].mxu0 %v1262
    %v1330 = vpop.f32.mrb[0].mxu0
    %v1331 = vadd.f32 0.0, %v1330
    %v1332 = vpop.f32.mrb[0].mxu0
    %1333 = vdwg.mxu0
    %v1335 = vsel %vm176, %v1255, 0
    %v1338 = vsel %vm176, %v1331, 0
    %1340 = vmatprep.subr.mxu0 0.0
    %1341 = vmatpush1.msra.mxu0 %v171
    %1342 = vmatprep.subr.mxu0 0.0
    %1343 = vmatpush1.msra.mxu0 0.0
    %1344 = vmatprep.subr.mxu0 0.0
    %1345 = vmatpush1.msra.mxu0 0.0
    %1346 = vmatprep.subr.mxu0 0.0
    %1347 = vmatpush1.msra.mxu0 0.0
    %1348 = vmatprep.subr.mxu0 0.0
    %1349 = vmatpush1.msra.mxu0 0.0
    %1350 = vmatprep.subr.mxu0 0.0
    %1351 = vmatpush1.msra.mxu0 0.0
    %1352 = vmatprep.subr.mxu0 0.0
    %1353 = vmatpush1.msra.mxu0 0.0
    %1354 = vmatprep.subr.mxu0 0.0
    %1355 = vmatpush1.msra.mxu0 0.0
    %1356 = vmatprep.subr.mxu0 0.0
    %1357 = vmatpush1.msra.mxu0 0.0
    %1358 = vmatprep.subr.mxu0 0.0
    %1359 = vmatpush1.msra.mxu0 0.0
    %1360 = vmatprep.subr.mxu0 0.0
    %1361 = vmatpush1.msra.mxu0 0.0
    %1362 = vmatprep.subr.mxu0 0.0
    %1363 = vmatpush1.msra.mxu0 0.0
    %1364 = vmatprep.subr.mxu0 0.0
    %1365 = vmatpush1.msra.mxu0 0.0
    %1366 = vmatprep.subr.mxu0 0.0
    %1367 = vmatpush1.msra.mxu0 0.0
    %1368 = vmatprep.subr.mxu0 0.0
    %1369 = vmatpush1.msra.mxu0 0.0
    %1370 = vmatprep.subr.mxu0 0.0
    %1371 = vmatpush1.msra.mxu0 0.0
    %1372 = vmatprep.subr.mxu0 0.0
    %1373 = vmatpush1.msra.mxu0 0.0
    %1374 = vmatprep.subr.mxu0 0.0
    %1375 = vmatpush1.msra.mxu0 0.0
    %1376 = vmatprep.subr.mxu0 0.0
    %1377 = vmatpush1.msra.mxu0 0.0
    %1378 = vmatprep.subr.mxu0 0.0
    %1379 = vmatpush1.msra.mxu0 0.0
    %1380 = vmatprep.subr.mxu0 0.0
    %1381 = vmatpush1.msra.mxu0 0.0
    %1382 = vmatprep.subr.mxu0 0.0
    %1383 = vmatpush1.msra.mxu0 0.0
    %1384 = vmatprep.subr.mxu0 0.0
    %1385 = vmatpush1.msra.mxu0 0.0
    %1386 = vmatprep.subr.mxu0 0.0
    %1387 = vmatpush1.msra.mxu0 0.0
    %1388 = vmatprep.subr.mxu0 0.0
    %1389 = vmatpush1.msra.mxu0 0.0
    %1390 = vmatprep.subr.mxu0 0.0
    %1391 = vmatpush1.msra.mxu0 0.0
    %1392 = vmatprep.subr.mxu0 0.0
    %1393 = vmatpush1.msra.mxu0 0.0
    %1394 = vmatprep.subr.mxu0 0.0
    %1395 = vmatpush1.msra.mxu0 0.0
    %1396 = vmatprep.subr.mxu0 0.0
    %1397 = vmatpush1.msra.mxu0 0.0
    %1398 = vmatprep.subr.mxu0 0.0
    %1399 = vmatpush1.msra.mxu0 0.0
    %1400 = vmatprep.subr.mxu0 0.0
    %1401 = vmatpush1.msra.mxu0 0.0
    %1402 = vmatprep.subr.mxu0 0.0
    %1403 = vmatpush1.msra.mxu0 0.0
    %1404 = vmatprep.mubr.f32.mxu0 0.0
    %1405 = vmatmul.mubr.f32.gmra.mrb[0].mxu0 %v1335
    %v1406 = vpop.f32.mrb[0].mxu0
    %v1407 = vadd.f32 0.0, %v1406
    %v1408 = vpop.f32.mrb[0].mxu0
    %1409 = vmatprep.mubr.f32.mxu0 0.0
    %1410 = vmatmul.mubr.f32.gmra.mrb[0].mxu0 %v1338
    %v1411 = vpop.f32.mrb[0].mxu0
    %v1412 = vadd.f32 0.0, %v1411
    %v1413 = vpop.f32.mrb[0].mxu0
    %1414 = vdwg.mxu0
    %v1415 = vadd.f32 %v993, %v1407
    %v1416 = vadd.f32 %v998, %v1412
    %1417 = vrot.lane.b32.xlu0 %v167, 104
    %v1418 = vpop.permute.xlu0 %1417
    %1419 = vrot.lane.b32.xlu0 %v159, 72
    %v1420 = vpop.permute.xlu0 %1419
    %v1421 = vsel %vm176, %v1418, 0
    %v1423 = vsel %vm176, %v1420, 0
    %1425 = vmatprep.subr.mxu0 0.0
    %1426 = vmatpush1.xpose.msra.mxu0 %v1423
    %1427 = vmatprep.subr.mxu0 0.0
    %1428 = vmatpush1.xpose.msra.mxu0 0.0
    %1429 = vmatprep.subr.mxu0 0.0
    %1430 = vmatpush1.xpose.msra.mxu0 0.0
    %1431 = vmatprep.subr.mxu0 0.0
    %1432 = vmatpush1.xpose.msra.mxu0 0.0
    %1433 = vmatprep.subr.mxu0 0.0
    %1434 = vmatpush1.xpose.msra.mxu0 0.0
    %1435 = vmatprep.subr.mxu0 0.0
    %1436 = vmatpush1.xpose.msra.mxu0 0.0
    %1437 = vmatprep.subr.mxu0 0.0
    %1438 = vmatpush1.xpose.msra.mxu0 0.0
    %1439 = vmatprep.subr.mxu0 0.0
    %1440 = vmatpush1.xpose.msra.mxu0 0.0
    %1441 = vmatprep.subr.mxu0 0.0
    %1442 = vmatpush1.xpose.msra.mxu0 0.0
    %1443 = vmatprep.subr.mxu0 0.0
    %1444 = vmatpush1.xpose.msra.mxu0 0.0
    %1445 = vmatprep.subr.mxu0 0.0
    %1446 = vmatpush1.xpose.msra.mxu0 0.0
    %1447 = vmatprep.subr.mxu0 0.0
    %1448 = vmatpush1.xpose.msra.mxu0 0.0
    %1449 = vmatprep.subr.mxu0 0.0
    %1450 = vmatpush1.xpose.msra.mxu0 0.0
    %1451 = vmatprep.subr.mxu0 0.0
    %1452 = vmatpush1.xpose.msra.mxu0 0.0
    %1453 = vmatprep.subr.mxu0 0.0
    %1454 = vmatpush1.xpose.msra.mxu0 0.0
    %1455 = vmatprep.subr.mxu0 0.0
    %1456 = vmatpush1.xpose.msra.mxu0 0.0
    %1457 = vmatprep.subr.mxu0 0.0
    %1458 = vmatpush1.xpose.msra.mxu0 0.0
    %1459 = vmatprep.subr.mxu0 0.0
    %1460 = vmatpush1.xpose.msra.mxu0 0.0
    %1461 = vmatprep.subr.mxu0 0.0
    %1462 = vmatpush1.xpose.msra.mxu0 0.0
    %1463 = vmatprep.subr.mxu0 0.0
    %1464 = vmatpush1.xpose.msra.mxu0 0.0
    %1465 = vmatprep.subr.mxu0 0.0
    %1466 = vmatpush1.xpose.msra.mxu0 0.0
    %1467 = vmatprep.subr.mxu0 0.0
    %1468 = vmatpush1.xpose.msra.mxu0 0.0
    %1469 = vmatprep.subr.mxu0 0.0
    %1470 = vmatpush1.xpose.msra.mxu0 0.0
    %1471 = vmatprep.subr.mxu0 0.0
    %1472 = vmatpush1.xpose.msra.mxu0 0.0
    %1473 = vmatprep.subr.mxu0 0.0
    %1474 = vmatpush1.xpose.msra.mxu0 0.0
    %1475 = vmatprep.subr.mxu0 0.0
    %1476 = vmatpush1.xpose.msra.mxu0 0.0
    %1477 = vmatprep.subr.mxu0 0.0
    %1478 = vmatpush1.xpose.msra.mxu0 0.0
    %1479 = vmatprep.subr.mxu0 0.0
    %1480 = vmatpush1.xpose.msra.mxu0 0.0
    %1481 = vmatprep.subr.mxu0 0.0
    %1482 = vmatpush1.xpose.msra.mxu0 0.0
    %1483 = vmatprep.subr.mxu0 0.0
    %1484 = vmatpush1.xpose.msra.mxu0 0.0
    %1485 = vmatprep.subr.mxu0 0.0
    %1486 = vmatpush1.xpose.msra.mxu0 0.0
    %1487 = vmatprep.subr.mxu0 0.0
    %1488 = vmatpush1.xpose.msra.mxu0 0.0
    %1489 = vmatprep.mubr.f32.mxu0 0.0
    %1490 = vmatmul.mubr.f32.gmra.mrb[0].mxu0 %v1421
    %v1491 = vpop.f32.mrb[0].mxu0
    %v1492 = vadd.f32 %v70, %v1491
    %v1493 = vpop.f32.mrb[0].mxu0
    %1494 = vdwg.mxu0
    %1495 = vrot.lane.b32.xlu0 %v168, 104
    %v1496 = vpop.permute.xlu0 %1495
    %1497 = vrot.lane.b32.xlu0 %v164, 72
    %v1498 = vpop.permute.xlu0 %1497
    %v1499 = vsel %vm176, %v1496, 0
    %v1501 = vsel %vm176, %v1498, 0
    %1503 = vmatprep.subr.mxu0 0.0
    %1504 = vmatpush1.xpose.msra.mxu0 %v1501
    %1505 = vmatprep.subr.mxu0 0.0
    %1506 = vmatpush1.xpose.msra.mxu0 0.0
    %1507 = vmatprep.subr.mxu0 0.0
    %1508 = vmatpush1.xpose.msra.mxu0 0.0
    %1509 = vmatprep.subr.mxu0 0.0
    %1510 = vmatpush1.xpose.msra.mxu0 0.0
    %1511 = vmatprep.subr.mxu0 0.0
    %1512 = vmatpush1.xpose.msra.mxu0 0.0
    %1513 = vmatprep.subr.mxu0 0.0
    %1514 = vmatpush1.xpose.msra.mxu0 0.0
    %1515 = vmatprep.subr.mxu0 0.0
    %1516 = vmatpush1.xpose.msra.mxu0 0.0
    %1517 = vmatprep.subr.mxu0 0.0
    %1518 = vmatpush1.xpose.msra.mxu0 0.0
    %1519 = vmatprep.subr.mxu0 0.0
    %1520 = vmatpush1.xpose.msra.mxu0 0.0
    %1521 = vmatprep.subr.mxu0 0.0
    %1522 = vmatpush1.xpose.msra.mxu0 0.0
    %1523 = vmatprep.subr.mxu0 0.0
    %1524 = vmatpush1.xpose.msra.mxu0 0.0
    %1525 = vmatprep.subr.mxu0 0.0
    %1526 = vmatpush1.xpose.msra.mxu0 0.0
    %1527 = vmatprep.subr.mxu0 0.0
    %1528 = vmatpush1.xpose.msra.mxu0 0.0
    %1529 = vmatprep.subr.mxu0 0.0
    %1530 = vmatpush1.xpose.msra.mxu0 0.0
    %1531 = vmatprep.subr.mxu0 0.0
    %1532 = vmatpush1.xpose.msra.mxu0 0.0
    %1533 = vmatprep.subr.mxu0 0.0
    %1534 = vmatpush1.xpose.msra.mxu0 0.0
    %1535 = vmatprep.subr.mxu0 0.0
    %1536 = vmatpush1.xpose.msra.mxu0 0.0
    %1537 = vmatprep.subr.mxu0 0.0
    %1538 = vmatpush1.xpose.msra.mxu0 0.0
    %1539 = vmatprep.subr.mxu0 0.0
    %1540 = vmatpush1.xpose.msra.mxu0 0.0
    %1541 = vmatprep.subr.mxu0 0.0
    %1542 = vmatpush1.xpose.msra.mxu0 0.0
    %1543 = vmatprep.subr.mxu0 0.0
    %1544 = vmatpush1.xpose.msra.mxu0 0.0
    %1545 = vmatprep.subr.mxu0 0.0
    %1546 = vmatpush1.xpose.msra.mxu0 0.0
    %1547 = vmatprep.subr.mxu0 0.0
    %1548 = vmatpush1.xpose.msra.mxu0 0.0
    %1549 = vmatprep.subr.mxu0 0.0
    %1550 = vmatpush1.xpose.msra.mxu0 0.0
    %1551 = vmatprep.subr.mxu0 0.0
    %1552 = vmatpush1.xpose.msra.mxu0 0.0
    %1553 = vmatprep.subr.mxu0 0.0
    %1554 = vmatpush1.xpose.msra.mxu0 0.0
    %1555 = vmatprep.subr.mxu0 0.0
    %1556 = vmatpush1.xpose.msra.mxu0 0.0
    %1557 = vmatprep.subr.mxu0 0.0
    %1558 = vmatpush1.xpose.msra.mxu0 0.0
    %1559 = vmatprep.subr.mxu0 0.0
    %1560 = vmatpush1.xpose.msra.mxu0 0.0
    %1561 = vmatprep.subr.mxu0 0.0
    %1562 = vmatpush1.xpose.msra.mxu0 0.0
    %1563 = vmatprep.subr.mxu0 0.0
    %1564 = vmatpush1.xpose.msra.mxu0 0.0
    %1565 = vmatprep.subr.mxu0 0.0
    %1566 = vmatpush1.xpose.msra.mxu0 0.0
    %1567 = vmatprep.mubr.f32.mxu0 0.0
    %1568 = vmatmul.mubr.f32.gmra.mrb[0].mxu0 %v1499
    %v1569 = vpop.f32.mrb[0].mxu0
    %v1570 = vadd.f32 %v71, %v1569
    %v1571 = vpop.f32.mrb[0].mxu0
    %1572 = vdwg.mxu0
    %v1573 = vsel %vm176, %v1492, -inf
    %1574 = vmax.xlane.f32.xlu0 %v1573
    %v1575 = vpop.xlane.xlu0 %1574
    %v1576 = vsel %vm176, %v1570, -inf
    %1577 = vmax.xlane.f32.xlu0 %v1576
    %v1578 = vpop.xlane.xlu0 %1577
    %v1579 = vsub.f32 %v1492, %v1575
    %v1580 = vsub.f32 %v1570, %v1578
    %v1581 = vmul.f32 %v1579, 1.442695
    %v1582 = vpow.pop %v1581
    %v1583 = vmul.f32 %v1580, 1.442695
    %v1584 = vpow.pop %v1583
    %v1585 = vsel %vm176, %v1582, 0.0
    %1586 = vadd.xlane.f32.xlu0 %v1585
    %v1587 = vpop.xlane.xlu0 %1586
    %v1588 = vsel %vm176, %v1584, 0.0
    %1589 = vadd.xlane.f32.xlu0 %v1588
    %v1590 = vpop.xlane.xlu0 %1589
    %v1591 = vrcp.pop %v1587
    %v1592 = vmul.f32 %v1582, %v1591
    %v1593 = vrcp.pop %v1590
    %v1594 = vmul.f32 %v1584, %v1593
    %s1595 = scalar_lea.vmem [#allocation6], 48
    %1596 = vst.msk [vmem:[%s1595] sm:$0xff] %vm176, %v1592
    %1597 = vst.msk [vmem:[%s1595 + $0x8] sm:$0xff] %vm176, %v1594
    %1598 = vrot.lane.b32.xlu0 %v159, 40
    %v1599 = vpop.permute.xlu0 %1598
    %v1602 = vsel %vm176, %v1592, 0
    %1604 = vmatprep.subr.mxu0 0.0
    %1605 = vmatpush1.msra.mxu0 %v1599
    %1606 = vmatprep.subr.mxu0 0.0
    %1607 = vmatpush1.msra.mxu0 0.0
    %1608 = vmatprep.subr.mxu0 0.0
    %1609 = vmatpush1.msra.mxu0 0.0
    %1610 = vmatprep.subr.mxu0 0.0
    %1611 = vmatpush1.msra.mxu0 0.0
    %1612 = vmatprep.subr.mxu0 0.0
    %1613 = vmatpush1.msra.mxu0 0.0
    %1614 = vmatprep.subr.mxu0 0.0
    %1615 = vmatpush1.msra.mxu0 0.0
    %1616 = vmatprep.subr.mxu0 0.0
    %1617 = vmatpush1.msra.mxu0 0.0
    %1618 = vmatprep.subr.mxu0 0.0
    %1619 = vmatpush1.msra.mxu0 0.0
    %1620 = vmatprep.subr.mxu0 0.0
    %1621 = vmatpush1.msra.mxu0 0.0
    %1622 = vmatprep.subr.mxu0 0.0
    %1623 = vmatpush1.msra.mxu0 0.0
    %1624 = vmatprep.subr.mxu0 0.0
    %1625 = vmatpush1.msra.mxu0 0.0
    %1626 = vmatprep.subr.mxu0 0.0
    %1627 = vmatpush1.msra.mxu0 0.0
    %1628 = vmatprep.subr.mxu0 0.0
    %1629 = vmatpush1.msra.mxu0 0.0
    %1630 = vmatprep.subr.mxu0 0.0
    %1631 = vmatpush1.msra.mxu0 0.0
    %1632 = vmatprep.subr.mxu0 0.0
    %1633 = vmatpush1.msra.mxu0 0.0
    %1634 = vmatprep.subr.mxu0 0.0
    %1635 = vmatpush1.msra.mxu0 0.0
    %1636 = vmatprep.subr.mxu0 0.0
    %1637 = vmatpush1.msra.mxu0 0.0
    %1638 = vmatprep.subr.mxu0 0.0
    %1639 = vmatpush1.msra.mxu0 0.0
    %1640 = vmatprep.subr.mxu0 0.0
    %1641 = vmatpush1.msra.mxu0 0.0
    %1642 = vmatprep.subr.mxu0 0.0
    %1643 = vmatpush1.msra.mxu0 0.0
    %1644 = vmatprep.subr.mxu0 0.0
    %1645 = vmatpush1.msra.mxu0 0.0
    %1646 = vmatprep.subr.mxu0 0.0
    %1647 = vmatpush1.msra.mxu0 0.0
    %1648 = vmatprep.subr.mxu0 0.0
    %1649 = vmatpush1.msra.mxu0 0.0
    %1650 = vmatprep.subr.mxu0 0.0
    %1651 = vmatpush1.msra.mxu0 0.0
    %1652 = vmatprep.subr.mxu0 0.0
    %1653 = vmatpush1.msra.mxu0 0.0
    %1654 = vmatprep.subr.mxu0 0.0
    %1655 = vmatpush1.msra.mxu0 0.0
    %1656 = vmatprep.subr.mxu0 0.0
    %1657 = vmatpush1.msra.mxu0 0.0
    %1658 = vmatprep.subr.mxu0 0.0
    %1659 = vmatpush1.msra.mxu0 0.0
    %1660 = vmatprep.subr.mxu0 0.0
    %1661 = vmatpush1.msra.mxu0 0.0
    %1662 = vmatprep.subr.mxu0 0.0
    %1663 = vmatpush1.msra.mxu0 0.0
    %1664 = vmatprep.subr.mxu0 0.0
    %1665 = vmatpush1.msra.mxu0 0.0
    %1666 = vmatprep.subr.mxu0 0.0
    %1667 = vmatpush1.msra.mxu0 0.0
    %1668 = vmatprep.mubr.f32.mxu0 0.0
    %1669 = vmatmul.mubr.f32.gmra.mrb[0].mxu0 %v1602
    %v1670 = vpop.f32.mrb[0].mxu0
    %v1671 = vadd.f32 0.0, %v1670
    %v1672 = vpop.f32.mrb[0].mxu0
    %1673 = vdwg.mxu0
    %1674 = vrot.lane.b32.xlu0 %v164, 40
    %v1675 = vpop.permute.xlu0 %1674
    %v1678 = vsel %vm176, %v1594, 0
    %1680 = vmatprep.subr.mxu0 0.0
    %1681 = vmatpush1.msra.mxu0 %v1675
    %1682 = vmatprep.subr.mxu0 0.0
    %1683 = vmatpush1.msra.mxu0 0.0
    %1684 = vmatprep.subr.mxu0 0.0
    %1685 = vmatpush1.msra.mxu0 0.0
    %1686 = vmatprep.subr.mxu0 0.0
    %1687 = vmatpush1.msra.mxu0 0.0
    %1688 = vmatprep.subr.mxu0 0.0
    %1689 = vmatpush1.msra.mxu0 0.0
    %1690 = vmatprep.subr.mxu0 0.0
    %1691 = vmatpush1.msra.mxu0 0.0
    %1692 = vmatprep.subr.mxu0 0.0
    %1693 = vmatpush1.msra.mxu0 0.0
    %1694 = vmatprep.subr.mxu0 0.0
    %1695 = vmatpush1.msra.mxu0 0.0
    %1696 = vmatprep.subr.mxu0 0.0
    %1697 = vmatpush1.msra.mxu0 0.0
    %1698 = vmatprep.subr.mxu0 0.0
    %1699 = vmatpush1.msra.mxu0 0.0
    %1700 = vmatprep.subr.mxu0 0.0
    %1701 = vmatpush1.msra.mxu0 0.0
    %1702 = vmatprep.subr.mxu0 0.0
    %1703 = vmatpush1.msra.mxu0 0.0
    %1704 = vmatprep.subr.mxu0 0.0
    %1705 = vmatpush1.msra.mxu0 0.0
    %1706 = vmatprep.subr.mxu0 0.0
    %1707 = vmatpush1.msra.mxu0 0.0
    %1708 = vmatprep.subr.mxu0 0.0
    %1709 = vmatpush1.msra.mxu0 0.0
    %1710 = vmatprep.subr.mxu0 0.0
    %1711 = vmatpush1.msra.mxu0 0.0
    %1712 = vmatprep.subr.mxu0 0.0
    %1713 = vmatpush1.msra.mxu0 0.0
    %1714 = vmatprep.subr.mxu0 0.0
    %1715 = vmatpush1.msra.mxu0 0.0
    %1716 = vmatprep.subr.mxu0 0.0
    %1717 = vmatpush1.msra.mxu0 0.0
    %1718 = vmatprep.subr.mxu0 0.0
    %1719 = vmatpush1.msra.mxu0 0.0
    %1720 = vmatprep.subr.mxu0 0.0
    %1721 = vmatpush1.msra.mxu0 0.0
    %1722 = vmatprep.subr.mxu0 0.0
    %1723 = vmatpush1.msra.mxu0 0.0
    %1724 = vmatprep.subr.mxu0 0.0
    %1725 = vmatpush1.msra.mxu0 0.0
    %1726 = vmatprep.subr.mxu0 0.0
    %1727 = vmatpush1.msra.mxu0 0.0
    %1728 = vmatprep.subr.mxu0 0.0
    %1729 = vmatpush1.msra.mxu0 0.0
    %1730 = vmatprep.subr.mxu0 0.0
    %1731 = vmatpush1.msra.mxu0 0.0
    %1732 = vmatprep.subr.mxu0 0.0
    %1733 = vmatpush1.msra.mxu0 0.0
    %1734 = vmatprep.subr.mxu0 0.0
    %1735 = vmatpush1.msra.mxu0 0.0
    %1736 = vmatprep.subr.mxu0 0.0
    %1737 = vmatpush1.msra.mxu0 0.0
    %1738 = vmatprep.subr.mxu0 0.0
    %1739 = vmatpush1.msra.mxu0 0.0
    %1740 = vmatprep.subr.mxu0 0.0
    %1741 = vmatpush1.msra.mxu0 0.0
    %1742 = vmatprep.subr.mxu0 0.0
    %1743 = vmatpush1.msra.mxu0 0.0
    %1744 = vmatprep.mubr.f32.mxu0 0.0
    %1745 = vmatmul.mubr.f32.gmra.mrb[0].mxu0 %v1678
    %v1746 = vpop.f32.mrb[0].mxu0
    %v1747 = vadd.f32 0.0, %v1746
    %v1748 = vpop.f32.mrb[0].mxu0
    %1749 = vdwg.mxu0
    %v1751 = vsel %vm176, %v1671, 0
    %v1754 = vsel %vm176, %v1747, 0
    %1756 = vmatprep.subr.mxu0 0.0
    %1757 = vmatpush1.msra.mxu0 %v172
    %1758 = vmatprep.subr.mxu0 0.0
    %1759 = vmatpush1.msra.mxu0 0.0
    %1760 = vmatprep.subr.mxu0 0.0
    %1761 = vmatpush1.msra.mxu0 0.0
    %1762 = vmatprep.subr.mxu0 0.0
    %1763 = vmatpush1.msra.mxu0 0.0
    %1764 = vmatprep.subr.mxu0 0.0
    %1765 = vmatpush1.msra.mxu0 0.0
    %1766 = vmatprep.subr.mxu0 0.0
    %1767 = vmatpush1.msra.mxu0 0.0
    %1768 = vmatprep.subr.mxu0 0.0
    %1769 = vmatpush1.msra.mxu0 0.0
    %1770 = vmatprep.subr.mxu0 0.0
    %1771 = vmatpush1.msra.mxu0 0.0
    %1772 = vmatprep.subr.mxu0 0.0
    %1773 = vmatpush1.msra.mxu0 0.0
    %1774 = vmatprep.subr.mxu0 0.0
    %1775 = vmatpush1.msra.mxu0 0.0
    %1776 = vmatprep.subr.mxu0 0.0
    %1777 = vmatpush1.msra.mxu0 0.0
    %1778 = vmatprep.subr.mxu0 0.0
    %1779 = vmatpush1.msra.mxu0 0.0
    %1780 = vmatprep.subr.mxu0 0.0
    %1781 = vmatpush1.msra.mxu0 0.0
    %1782 = vmatprep.subr.mxu0 0.0
    %1783 = vmatpush1.msra.mxu0 0.0
    %1784 = vmatprep.subr.mxu0 0.0
    %1785 = vmatpush1.msra.mxu0 0.0
    %1786 = vmatprep.subr.mxu0 0.0
    %1787 = vmatpush1.msra.mxu0 0.0
    %1788 = vmatprep.subr.mxu0 0.0
    %1789 = vmatpush1.msra.mxu0 0.0
    %1790 = vmatprep.subr.mxu0 0.0
    %1791 = vmatpush1.msra.mxu0 0.0
    %1792 = vmatprep.subr.mxu0 0.0
    %1793 = vmatpush1.msra.mxu0 0.0
    %1794 = vmatprep.subr.mxu0 0.0
    %1795 = vmatpush1.msra.mxu0 0.0
    %1796 = vmatprep.subr.mxu0 0.0
    %1797 = vmatpush1.msra.mxu0 0.0
    %1798 = vmatprep.subr.mxu0 0.0
    %1799 = vmatpush1.msra.mxu0 0.0
    %1800 = vmatprep.subr.mxu0 0.0
    %1801 = vmatpush1.msra.mxu0 0.0
    %1802 = vmatprep.subr.mxu0 0.0
    %1803 = vmatpush1.msra.mxu0 0.0
    %1804 = vmatprep.subr.mxu0 0.0
    %1805 = vmatpush1.msra.mxu0 0.0
    %1806 = vmatprep.subr.mxu0 0.0
    %1807 = vmatpush1.msra.mxu0 0.0
    %1808 = vmatprep.subr.mxu0 0.0
    %1809 = vmatpush1.msra.mxu0 0.0
    %1810 = vmatprep.subr.mxu0 0.0
    %1811 = vmatpush1.msra.mxu0 0.0
    %1812 = vmatprep.subr.mxu0 0.0
    %1813 = vmatpush1.msra.mxu0 0.0
    %1814 = vmatprep.subr.mxu0 0.0
    %1815 = vmatpush1.msra.mxu0 0.0
    %1816 = vmatprep.subr.mxu0 0.0
    %1817 = vmatpush1.msra.mxu0 0.0
    %1818 = vmatprep.subr.mxu0 0.0
    %1819 = vmatpush1.msra.mxu0 0.0
    %1820 = vmatprep.mubr.f32.mxu0 0.0
    %1821 = vmatmul.mubr.f32.gmra.mrb[0].mxu0 %v1751
    %v1822 = vpop.f32.mrb[0].mxu0
    %v1823 = vadd.f32 0.0, %v1822
    %v1824 = vpop.f32.mrb[0].mxu0
    %1825 = vmatprep.mubr.f32.mxu0 0.0
    %1826 = vmatmul.mubr.f32.gmra.mrb[0].mxu0 %v1754
    %v1827 = vpop.f32.mrb[0].mxu0
    %v1828 = vadd.f32 0.0, %v1827
    %v1829 = vpop.f32.mrb[0].mxu0
    %1830 = vdwg.mxu0
    %v1831 = vadd.f32 %v1415, %v1823
    %v1832 = vadd.f32 %v1416, %v1828
    %v1833 = vld [vmem:[%s6] sm:$0x1]
    %v1835 = vlaneseq
    %v1836 = vshrl.u32 %v1835, 7
    %v1837 = vsub.s32 0, %v1836
    %v1838 = vrot.slane %v1833, %v1837
    %v1840 = vadd.f32 %v1831, %v1838
    %v1841 = vadd.f32 %v1832, %v1838
    %v1842 = vadd.f32 %v1840, %v68
    %v1843 = vadd.f32 %v1841, %v69
    %v1844 = vsel %vm85, %v1842, 0.0
    %1845 = vadd.xlane.f32.xlu0 %v1844
    %v1846 = vpop.xlane.xlu0 %1845
    %v1847 = vsel %vm85, %v1843, 0.0
    %1848 = vadd.xlane.f32.xlu0 %v1847
    %v1849 = vpop.xlane.xlu0 %1848
    %v1850 = vrcp.pop 32.0
    %v1851 = vmul.f32 %v1846, %v1850
    %v1852 = vmul.f32 %v1849, %v1850
    %v1853 = vsub.f32 %v1842, %v1851
    %v1854 = vsub.f32 %v1843, %v1852
    %v1855 = vmul.f32 %v1853, %v1853
    %v1856 = vmul.f32 %v1854, %v1854
    %v1857 = vsel %vm85, %v1855, 0.0
    %1858 = vadd.xlane.f32.xlu0 %v1857
    %v1859 = vpop.xlane.xlu0 %1858
    %v1860 = vsel %vm85, %v1856, 0.0
    %1861 = vadd.xlane.f32.xlu0 %v1860
    %v1862 = vpop.xlane.xlu0 %1861
    %v1863 = vmul.f32 %v1859, %v1850
    %v1864 = vmul.f32 %v1862, %v1850
    %v1865 = vadd.f32 %v1863, 1e-05
    %v1866 = vadd.f32 %v1864, 1e-05
    %v1867 = vrsqrt.pop %v1865
    %v1868 = vrsqrt.pop %v1866
    %v1869 = vmul.f32 %v1853, %v1867
    %v1870 = vmul.f32 %v1854, %v1868
    %v1871 = vld [vmem:[%s7] sm:$0x1]
    %v1873 = vlaneseq
    %v1874 = vshrl.u32 %v1873, 7
    %v1875 = vsub.s32 0, %v1874
    %v1876 = vrot.slane %v1871, %v1875
    %v1878 = vmul.f32 %v1869, %v1876
    %v1879 = vmul.f32 %v1870, %v1876
    %v1880 = vld [vmem:[%s8] sm:$0x1]
    %v1882 = vlaneseq
    %v1883 = vshrl.u32 %v1882, 7
    %v1884 = vsub.s32 0, %v1883
    %v1885 = vrot.slane %v1880, %v1884
    %v1887 = vadd.f32 %v1878, %v1885
    %v1888 = vadd.f32 %v1879, %v1885
    %1890 = vset.pattern.permute.xlu0 0
    %1891 = vperm.xlu0 %1890, %v72
    %v1892 = vpop.permute.xlu0 %1891
    %1895 = vset.pattern.permute.xlu0 0
    %1896 = vperm.xlu0 %1895, %v73
    %v1897 = vpop.permute.xlu0 %1896
    %v1899 = vmul.f32 %v1887, %v1892
    %v1900 = vmul.f32 %v1888, %v1897
    %v1901 = vld [vmem:[%s9] sm:$0xff]
    %v1902 = vld [vmem:[%s9 + $0x8] sm:$0xff]
    %v1903 = vld [vmem:[%s9 + $0x10] sm:$0xff]
    %v1904 = vld [vmem:[%s9 + $0x18] sm:$0xff]
    %v1905 = vld [vmem:[%s10] sm:$0x1]
    %v1907 = vlaneseq
    %v1908 = vshrl.u32 %v1907, 7
    %v1909 = vsub.s32 0, %v1908
    %v1910 = vrot.slane %v1905, %v1909
    %v1913 = vsel %vm85, %v1899, 0
    %v1916 = vsel %vm85, %v1900, 0
    %1918 = vmatprep.subr.mxu0 0.0
    %1919 = vmatpush1.msra.mxu0 %v1901
    %1920 = vmatprep.subr.mxu0 0.0
    %1921 = vmatpush1.msra.mxu0 %v1902
    %1922 = vmatprep.subr.mxu0 0.0
    %1923 = vmatpush1.msra.mxu0 %v1903
    %1924 = vmatprep.subr.mxu0 0.0
    %1925 = vmatpush1.msra.mxu0 %v1904
    %1926 = vmatprep.subr.mxu0 0.0
    %1927 = vmatpush1.msra.mxu0 0.0
    %1928 = vmatprep.subr.mxu0 0.0
    %1929 = vmatpush1.msra.mxu0 0.0
    %1930 = vmatprep.subr.mxu0 0.0
    %1931 = vmatpush1.msra.mxu0 0.0
    %1932 = vmatprep.subr.mxu0 0.0
    %1933 = vmatpush1.msra.mxu0 0.0
    %1934 = vmatprep.subr.mxu0 0.0
    %1935 = vmatpush1.msra.mxu0 0.0
    %1936 = vmatprep.subr.mxu0 0.0
    %1937 = vmatpush1.msra.mxu0 0.0
    %1938 = vmatprep.subr.mxu0 0.0
    %1939 = vmatpush1.msra.mxu0 0.0
    %1940 = vmatprep.subr.mxu0 0.0
    %1941 = vmatpush1.msra.mxu0 0.0
    %1942 = vmatprep.subr.mxu0 0.0
    %1943 = vmatpush1.msra.mxu0 0.0
    %1944 = vmatprep.subr.mxu0 0.0
    %1945 = vmatpush1.msra.mxu0 0.0
    %1946 = vmatprep.subr.mxu0 0.0
    %1947 = vmatpush1.msra.mxu0 0.0
    %1948 = vmatprep.subr.mxu0 0.0
    %1949 = vmatpush1.msra.mxu0 0.0
    %1950 = vmatprep.subr.mxu0 0.0
    %1951 = vmatpush1.msra.mxu0 0.0
    %1952 = vmatprep.subr.mxu0 0.0
    %1953 = vmatpush1.msra.mxu0 0.0
    %1954 = vmatprep.subr.mxu0 0.0
    %1955 = vmatpush1.msra.mxu0 0.0
    %1956 = vmatprep.subr.mxu0 0.0
    %1957 = vmatpush1.msra.mxu0 0.0
    %1958 = vmatprep.subr.mxu0 0.0
    %1959 = vmatpush1.msra.mxu0 0.0
    %1960 = vmatprep.subr.mxu0 0.0
    %1961 = vmatpush1.msra.mxu0 0.0
    %1962 = vmatprep.subr.mxu0 0.0
    %1963 = vmatpush1.msra.mxu0 0.0
    %1964 = vmatprep.subr.mxu0 0.0
    %1965 = vmatpush1.msra.mxu0 0.0
    %1966 = vmatprep.subr.mxu0 0.0
    %1967 = vmatpush1.msra.mxu0 0.0
    %1968 = vmatprep.subr.mxu0 0.0
    %1969 = vmatpush1.msra.mxu0 0.0
    %1970 = vmatprep.subr.mxu0 0.0
    %1971 = vmatpush1.msra.mxu0 0.0
    %1972 = vmatprep.subr.mxu0 0.0
    %1973 = vmatpush1.msra.mxu0 0.0
    %1974 = vmatprep.subr.mxu0 0.0
    %1975 = vmatpush1.msra.mxu0 0.0
    %1976 = vmatprep.subr.mxu0 0.0
    %1977 = vmatpush1.msra.mxu0 0.0
    %1978 = vmatprep.subr.mxu0 0.0
    %1979 = vmatpush1.msra.mxu0 0.0
    %1980 = vmatprep.subr.mxu0 0.0
    %1981 = vmatpush1.msra.mxu0 0.0
    %1982 = vmatprep.mubr.f32.mxu0 0.0
    %1983 = vmatmul.mubr.f32.gmra.mrb[0].mxu0 %v1913
    %v1984 = vpop.f32.mrb[0].mxu0
    %v1985 = vadd.f32 %v1910, %v1984
    %v1986 = vpop.f32.mrb[0].mxu0
    %1987 = vmatprep.mubr.f32.mxu0 0.0
    %1988 = vmatmul.mubr.f32.gmra.mrb[0].mxu0 %v1916
    %v1989 = vpop.f32.mrb[0].mxu0
    %v1990 = vadd.f32 %v1910, %v1989
    %v1991 = vpop.f32.mrb[0].mxu0
    %1992 = vdwg.mxu0
    %v1993 = vmax.f32 %v1985, 0.0
    %v1994 = vmax.f32 %v1990, 0.0
    %v1995 = vld [vmem:[%s11] sm:$0xff]
    %v1996 = vld [vmem:[%s11 + $0x8] sm:$0xff]
    %v1997 = vld [vmem:[%s11 + $0x10] sm:$0xff]
    %v1998 = vld [vmem:[%s11 + $0x18] sm:$0xff]
    %v1999 = vld [vmem:[%s11 + $0x20] sm:$0xff]
    %v2000 = vld [vmem:[%s11 + $0x28] sm:$0xff]
    %v2001 = vld [vmem:[%s11 + $0x30] sm:$0xff]
    %v2002 = vld [vmem:[%s11 + $0x38] sm:$0xff]
    %v2003 = vld [vmem:[%s12] sm:$0x1]
    %v2005 = vlaneseq
    %v2006 = vshrl.u32 %v2005, 7
    %v2007 = vsub.s32 0, %v2006
    %v2008 = vrot.slane %v2003, %v2007
    %vm2010 = vcmask 523264
    %v2012 = vsel %vm2010, %v1993, 0
    %v2015 = vsel %vm2010, %v1994, 0
    %2017 = vmatprep.subr.mxu0 0.0
    %2018 = vmatpush1.msra.mxu0 %v1995
    %2019 = vmatprep.subr.mxu0 0.0
    %2020 = vmatpush1.msra.mxu0 %v1996
    %2021 = vmatprep.subr.mxu0 0.0
    %2022 = vmatpush1.msra.mxu0 %v1997
    %2023 = vmatprep.subr.mxu0 0.0
    %2024 = vmatpush1.msra.mxu0 %v1998
    %2025 = vmatprep.subr.mxu0 0.0
    %2026 = vmatpush1.msra.mxu0 %v1999
    %2027 = vmatprep.subr.mxu0 0.0
    %2028 = vmatpush1.msra.mxu0 %v2000
    %2029 = vmatprep.subr.mxu0 0.0
    %2030 = vmatpush1.msra.mxu0 %v2001
    %2031 = vmatprep.subr.mxu0 0.0
    %2032 = vmatpush1.msra.mxu0 %v2002
    %2033 = vmatprep.subr.mxu0 0.0
    %2034 = vmatpush1.msra.mxu0 0.0
    %2035 = vmatprep.subr.mxu0 0.0
    %2036 = vmatpush1.msra.mxu0 0.0
    %2037 = vmatprep.subr.mxu0 0.0
    %2038 = vmatpush1.msra.mxu0 0.0
    %2039 = vmatprep.subr.mxu0 0.0
    %2040 = vmatpush1.msra.mxu0 0.0
    %2041 = vmatprep.subr.mxu0 0.0
    %2042 = vmatpush1.msra.mxu0 0.0
    %2043 = vmatprep.subr.mxu0 0.0
    %2044 = vmatpush1.msra.mxu0 0.0
    %2045 = vmatprep.subr.mxu0 0.0
    %2046 = vmatpush1.msra.mxu0 0.0
    %2047 = vmatprep.subr.mxu0 0.0
    %2048 = vmatpush1.msra.mxu0 0.0
    %2049 = vmatprep.subr.mxu0 0.0
    %2050 = vmatpush1.msra.mxu0 0.0
    %2051 = vmatprep.subr.mxu0 0.0
    %2052 = vmatpush1.msra.mxu0 0.0
    %2053 = vmatprep.subr.mxu0 0.0
    %2054 = vmatpush1.msra.mxu0 0.0
    %2055 = vmatprep.subr.mxu0 0.0
    %2056 = vmatpush1.msra.mxu0 0.0
    %2057 = vmatprep.subr.mxu0 0.0
    %2058 = vmatpush1.msra.mxu0 0.0
    %2059 = vmatprep.subr.mxu0 0.0
    %2060 = vmatpush1.msra.mxu0 0.0
    %2061 = vmatprep.subr.mxu0 0.0
    %2062 = vmatpush1.msra.mxu0 0.0
    %2063 = vmatprep.subr.mxu0 0.0
    %2064 = vmatpush1.msra.mxu0 0.0
    %2065 = vmatprep.subr.mxu0 0.0
    %2066 = vmatpush1.msra.mxu0 0.0
    %2067 = vmatprep.subr.mxu0 0.0
    %2068 = vmatpush1.msra.mxu0 0.0
    %2069 = vmatprep.subr.mxu0 0.0
    %2070 = vmatpush1.msra.mxu0 0.0
    %2071 = vmatprep.subr.mxu0 0.0
    %2072 = vmatpush1.msra.mxu0 0.0
    %2073 = vmatprep.subr.mxu0 0.0
    %2074 = vmatpush1.msra.mxu0 0.0
    %2075 = vmatprep.subr.mxu0 0.0
    %2076 = vmatpush1.msra.mxu0 0.0
    %2077 = vmatprep.subr.mxu0 0.0
    %2078 = vmatpush1.msra.mxu0 0.0
    %2079 = vmatprep.subr.mxu0 0.0
    %2080 = vmatpush1.msra.mxu0 0.0
    %2081 = vmatprep.mubr.f32.mxu0 0.0
    %2082 = vmatmul.mubr.f32.gmra.mrb[0].mxu0 %v2012
    %v2083 = vpop.f32.mrb[0].mxu0
    %v2084 = vadd.f32 %v2008, %v2083
    %v2085 = vpop.f32.mrb[0].mxu0
    %2086 = vmatprep.mubr.f32.mxu0 0.0
    %2087 = vmatmul.mubr.f32.gmra.mrb[0].mxu0 %v2015
    %v2088 = vpop.f32.mrb[0].mxu0
    %v2089 = vadd.f32 %v2008, %v2088
    %v2090 = vpop.f32.mrb[0].mxu0
    %2091 = vdwg.mxu0
    %v2092 = vadd.f32 %v2084, %v1899
    %v2093 = vadd.f32 %v2089, %v1900
    %v2094 = vsel %vm85, %v2092, 0.0
    %2095 = vadd.xlane.f32.xlu0 %v2094
    %v2096 = vpop.xlane.xlu0 %2095
    %v2097 = vsel %vm85, %v2093, 0.0
    %2098 = vadd.xlane.f32.xlu0 %v2097
    %v2099 = vpop.xlane.xlu0 %2098
    %v2100 = vmul.f32 %v2096, %v1850
    %v2101 = vmul.f32 %v2099, %v1850
    %v2102 = vsub.f32 %v2092, %v2100
    %v2103 = vsub.f32 %v2093, %v2101
    %v2104 = vmul.f32 %v2102, %v2102
    %v2105 = vmul.f32 %v2103, %v2103
    %v2106 = vsel %vm85, %v2104, 0.0
    %2107 = vadd.xlane.f32.xlu0 %v2106
    %v2108 = vpop.xlane.xlu0 %2107
    %v2109 = vsel %vm85, %v2105, 0.0
    %2110 = vadd.xlane.f32.xlu0 %v2109
    %v2111 = vpop.xlane.xlu0 %2110
    %v2112 = vmul.f32 %v2108, %v1850
    %v2113 = vmul.f32 %v2111, %v1850
    %v2114 = vadd.f32 %v2112, 1e-05
    %v2115 = vadd.f32 %v2113, 1e-05
    %v2116 = vrsqrt.pop %v2114
    %v2117 = vrsqrt.pop %v2115
    %v2118 = vmul.f32 %v2102, %v2116
    %v2119 = vmul.f32 %v2103, %v2117
    %v2120 = vld [vmem:[%s13] sm:$0x1]
    %v2122 = vlaneseq
    %v2123 = vshrl.u32 %v2122, 7
    %v2124 = vsub.s32 0, %v2123
    %v2125 = vrot.slane %v2120, %v2124
    %v2127 = vmul.f32 %v2118, %v2125
    %v2128 = vmul.f32 %v2119, %v2125
    %v2129 = vld [vmem:[%s14] sm:$0x1]
    %v2131 = vlaneseq
    %v2132 = vshrl.u32 %v2131, 7
    %v2133 = vsub.s32 0, %v2132
    %v2134 = vrot.slane %v2129, %v2133
    %v2136 = vadd.f32 %v2127, %v2134
    %v2137 = vadd.f32 %v2128, %v2134
    %v2138 = vmul.f32 %v2136, %v1892
    %v2139 = vmul.f32 %v2137, %v1897
    %2140 = vst.msk [vmem:[#allocation5] sm:$0xff] %vm85, %v2138
    %2141 = vst.msk [vmem:[#allocation5 + $0x8] sm:$0xff] %vm85, %v2139
    // Predicated region
    $region66: #{tpu_custom_call.1} parent=1 // pred_check
      _
    $region67: #{tpu_custom_call.1} parent=1 // pred_check_branch
      %2143 = sbr.rel (0) target = $region69
    $region68: #{tpu_custom_call.1} parent=1 // pred_region
      %s2145 = ssub.s32 256, 256
      %2146 = vsyncadd [#allocation4], %s2145
      %s2147 = sshll.u32 [#allocation5], 4
      %s2148 = int_to_ptr.vmem [resolvable:$true] %s2147
      %2153 = dma.vmem_to_hbm [thread:$0]  %s2148, 256, %s15, [#allocation4], 128, 128, 8
    $region69: #{tpu_custom_call.1} parent=1 // pred_fallthru
      _
    // Predicated region
    $region70: #{tpu_custom_call.1} parent=1 // pred_check
      _
    $region71: #{tpu_custom_call.1} parent=1 // pred_check_branch
      %2155 = sbr.rel (0) target = $region73
    $region72: #{tpu_custom_call.1} parent=1 // pred_region
      %s2157 = ssub.s32 1024, 1024
      %2158 = vsyncadd [#allocation7], %s2157
      %s2159 = sshll.u32 [#allocation6], 4
      %s2160 = int_to_ptr.vmem [resolvable:$true] %s2159
      %2165 = dma.vmem_to_hbm [thread:$0]  %s2160, 1024, %s16, [#allocation7], 128, 128, 8
    $region73: #{tpu_custom_call.1} parent=1 // pred_fallthru
      _
    // Predicated region
    $region74: #{tpu_custom_call.1} parent=1 // pred_check
      _
    $region75: #{tpu_custom_call.1} parent=1 // pred_check_branch
      %2167 = sbr.rel (0) target = $region77
    $region76: #{tpu_custom_call.1} parent=1 // pred_region
      %2168 = dma.done [#allocation4], 256
    $region77: #{tpu_custom_call.1} parent=1 // pred_fallthru
      _
    // Predicated region
    $region78: #{tpu_custom_call.1} parent=1 // pred_check
      _
    $region79: #{tpu_custom_call.1} parent=1 // pred_check_branch
      %2170 = sbr.rel (0) target = $region81
    $region80: #{tpu_custom_call.1} parent=1 // pred_region
      %2171 = dma.done [#allocation7], 1024
    $region81: #{tpu_custom_call.1} parent=1 // pred_fallthru
      _
    %2172 = vsyncpa [#allocation3], 1
    %2173 = vsyncpa [#allocation4], 1
    %2174 = vsyncpa [#allocation7], 1

</llo_original>
